<compile_context>
chip_gen: v7x
topology: tpu7x:2x2x1
jax: 0.10.0
libtpu: 0.0.40
codegen_flags: <defaults>
</compile_context>

<pallas_src>
import jax
import jax.numpy as jnp
import numpy as np
from jax.experimental import pallas as pl
from jax.experimental.pallas import tpu as pltpu


LANE = 128  # TPU lane width; feature dim is zero-padded to this


def _silu(x):
    return x * jax.nn.sigmoid(x)


# ----------------------------------------------------------------------------
# Fused Pallas kernel
# ----------------------------------------------------------------------------

def global_mp_kernel(src_col_ref, dst_col_ref, h_ref, ea_ref,
                     w_ref, b_ref, xe_w_ref, o_ref):
    """Fully fused Global_MP forward.

    src_col_ref : [E, 1] int32   edge_index[0] (gather/scatter one-hot)
    dst_col_ref : [E, 1] int32   edge_index[1] (gather one-hot)
    h_ref       : [N, Dp] f32    node features (lane padded)
    ea_ref      : [E, Dp] f32    edge features (lane padded)
    w_ref       : [10, Dp, Dp]   0:h_mlp 1:linear 2:mlp 3:res1_w1 4:res1_w2
                                 5:res2_w1 6:res2_w2 7:res3_w1 8:res3_w2 9:xe_w3
    b_ref       : [9, Dp]        0:h_mlp 1:x_edge 2:mlp 3:res1_b1 4:res1_b2
                                 5:res2_b1 6:res2_b2 7:res3_b1 8:res3_b2
    xe_w_ref    : [2*Dp, Dp]     x_edge MLP weight for cat(x_i, x_j) (W1;W2)
    o_ref       : [N, Dp] f32
    """
    n = h_ref.shape[0]
    e = ea_ref.shape[0]

    h0 = h_ref[...]
    ea = ea_ref[...]
    cdt = w_ref.dtype  # MXU operand dtype (f32, or bf16 on v6e/v7x)

    def mm(x, w):
        return jnp.dot(x.astype(cdt), w, preferred_element_type=jnp.float32)

    def lin_silu(x, wi, bi):
        return _silu(mm(x, w_ref[wi]) + b_ref[bi:bi + 1, :])

    def res(x, wi1, bi1, wi2, bi2):
        return lin_silu(lin_silu(x, wi1, bi1), wi2, bi2) + x

    # One-hot gather matrices: built once, reused by both propagate phases.
    # g_src also serves as the scatter matrix via a transposed-LHS dot_general
    # (no separate [N, E] one-hot is materialized).
    node_en = jax.lax.broadcasted_iota(jnp.int32, (e, n), 1)   # node id per lane
    g_src = (node_en == src_col_ref[...]).astype(cdt)          # [E, N]
    g_dst = (node_en == dst_col_ref[...]).astype(cdt)          # [E, N]

    # Loop-invariant edge terms (identical in both propagate calls):
    #   linear(edge_attr)            -> ea_lin
    #   ea contribution of x_edge MLP (ea @ W3 + b) -> pre_ea
    ea_lin = mm(ea, w_ref[1])                                   # [E, Dp]
    pre_ea = mm(ea, w_ref[9]) + b_ref[1:2, :]                   # [E, Dp]

    def propagate(x):
        x_c = x.astype(cdt)
        # gather x_i = x[edge_index[0]], x_j = x[edge_index[1]] on the MXU
        x_i = jnp.dot(g_src, x_c, preferred_element_type=jnp.float32)   # [E, Dp]
        x_j = jnp.dot(g_dst, x_c, preferred_element_type=jnp.float32)   # [E, Dp]
        # x_edge MLP: K = 2*Dp contraction over cat(x_i, x_j); ea term hoisted.
        cat_ij = jnp.concatenate([x_i, x_j], axis=-1)                    # [E, 2*Dp]
        x_edge = _silu(mm(cat_ij, xe_w_ref[...]) + pre_ea)               # [E, Dp]
        msg = ea_lin * x_edge                                            # [E, Dp]
        # scatter-add by edge_index[0]: transposed-LHS matmul on g_src
        # (contract over the edge axis); self-loop messages reduce to "+ x".
        scat = jax.lax.dot_general(
            g_src, msg.astype(cdt),
            dimension_numbers=(((0,), (0,)), ((), ())),
            preferred_element_type=jnp.float32)                          # [N, Dp]
        return scat + x

    h = lin_silu(h0, 0, 0)            # h_mlp
    h = propagate(h)
    h = res(h, 3, 3, 4, 4)            # res1
    h = lin_silu(h, 2, 2) + h0        # mlp + residual
    h = res(h, 5, 5, 6, 6)            # res2
    h = res(h, 7, 7, 8, 8)            # res3
    h = propagate(h)

    o_ref[...] = h.astype(o_ref.dtype)


# ----------------------------------------------------------------------------
# Wrapper: pack / lane-pad params, single pallas_call, slice result
# ----------------------------------------------------------------------------

def global_mp_forward(h, edge_attr, edge_index, p, *, compute_dtype=jnp.float32):
    # compute_dtype=jnp.bfloat16 is the v6e/v7x knob (2x MXU, half the one-hot
    # VMEM); re-validate with a looser (~2e-2) tolerance if enabled.
    n, dim = h.shape
    e = edge_attr.shape[0]
    dp = max(LANE, dim)
    pad = dp - dim

    def pad_f(x):    # pad last (feature) dim to dp
        return jnp.pad(x, ((0, 0), (0, pad)))

    def pad_w(w):    # pad square weight to [dp, dp]
        return jnp.pad(w, ((0, pad), (0, pad)))

    w_stack = jnp.stack([
        pad_w(p["h_mlp_w"]), pad_w(p["lin_w"]), pad_w(p["mlp_w"]),
        pad_w(p["res1_w1"]), pad_w(p["res1_w2"]),
        pad_w(p["res2_w1"]), pad_w(p["res2_w2"]),
        pad_w(p["res3_w1"]), pad_w(p["res3_w2"]),
        pad_w(p["xe_w3"]),
    ]).astype(compute_dtype)                                    # [10, Dp, Dp]
    b_stack = jnp.concatenate([
        pad_f(p["h_mlp_b"]), pad_f(p["xe_b"]), pad_f(p["mlp_b"]),
        pad_f(p["res1_b1"]), pad_f(p["res1_b2"]),
        pad_f(p["res2_b1"]), pad_f(p["res2_b2"]),
        pad_f(p["res3_b1"]), pad_f(p["res3_b2"]),
    ], axis=0)                                                  # [9, Dp]  (f32)
    xe_w = jnp.concatenate(
        [pad_w(p["xe_w1"]), pad_w(p["xe_w2"])], axis=0).astype(compute_dtype)  # [2*Dp, Dp]

    src = edge_index[0].astype(jnp.int32)
    dst = edge_index[1].astype(jnp.int32)

    # Rough VMEM footprint (bytes, f32 upper bound) with 2x headroom.
    est = 4 * (8 * n * dp + 12 * e * dp + 2 * e * n + 12 * dp * dp + 9 * dp)
    vmem_limit = int(min(100 * 2**20, max(16 * 2**20, 2 * est)))

    out = pl.pallas_call(
        global_mp_kernel,
        out_shape=jax.ShapeDtypeStruct((n, dp), h.dtype),
        in_specs=[pl.BlockSpec(memory_space=pltpu.MemorySpace.VMEM)] * 7,
        out_specs=pl.BlockSpec(memory_space=pltpu.MemorySpace.VMEM),
        compiler_params=pltpu.CompilerParams(vmem_limit_bytes=vmem_limit),
    )(src.reshape(e, 1), dst.reshape(e, 1),
      pad_f(h), pad_f(edge_attr), w_stack, b_stack, xe_w)

    return out[:, :dim]


# ----------------------------------------------------------------------------
# Pure-JAX reference (silent correctness check)
# ----------------------------------------------------------------------------

def _ref_propagate(x, edge_attr, edge_index, p):
    src, dst = edge_index[0], edge_index[1]
    x_i, x_j, ea = x[src], x[dst], edge_attr
    pre = x_i @ p["xe_w1"] + x_j @ p["xe_w2"] + ea @ p["xe_w3"] + p["xe_b"]
    x_edge = pre * jax.nn.sigmoid(pre)
    msgs = (ea @ p["lin_w"]) * x_edge
    out = jnp.zeros_like(x).at[src].add(msgs)
    return out + x  # self loops


def _ref_forward(h, edge_attr, edge_index, p):
    def lin_silu(x, w, b):
        y = x @ w + b
        return y * jax.nn.sigmoid(y)

    def res(x, w1, b1, w2, b2):
        return lin_silu(lin_silu(x, w1, b1), w2, b2) + x

    res_h = h
    h = lin_silu(h, p["h_mlp_w"], p["h_mlp_b"])
    h = _ref_propagate(h, edge_attr, edge_index, p)
    h = res(h, p["res1_w1"], p["res1_b1"], p["res1_w2"], p["res1_b2"])
    h = lin_silu(h, p["mlp_w"], p["mlp_b"]) + res_h
    h = res(h, p["res2_w1"], p["res2_b1"], p["res2_w2"], p["res2_b2"])
    h = res(h, p["res3_w1"], p["res3_b1"], p["res3_w2"], p["res3_b2"])
    h = _ref_propagate(h, edge_attr, edge_index, p)
    return h


# ----------------------------------------------------------------------------
# main
# ----------------------------------------------------------------------------

if __name__ == "__main__":
    key = jax.random.PRNGKey(0)
    N, E, DIM = 8, 16, 32

    keys = jax.random.split(key, 32)
    ki = iter(keys)

    def w(shape, scale=0.1):
        return scale * jax.random.normal(next(ki), shape, dtype=jnp.float32)

    params = {
        # h_mlp: MLP([dim, dim]) -> Linear(dim, dim) + SiLU
        "h_mlp_w": w((DIM, DIM)), "h_mlp_b": w((1, DIM)),
        # mlp: MLP([dim, dim])
        "mlp_w": w((DIM, DIM)), "mlp_b": w((1, DIM)),
        # res blocks: MLP([dim, dim, dim]) each = 2 x (Linear + SiLU)
        "res1_w1": w((DIM, DIM)), "res1_b1": w((1, DIM)),
        "res1_w2": w((DIM, DIM)), "res1_b2": w((1, DIM)),
        "res2_w1": w((DIM, DIM)), "res2_b1": w((1, DIM)),
        "res2_w2": w((DIM, DIM)), "res2_b2": w((1, DIM)),
        "res3_w1": w((DIM, DIM)), "res3_b1": w((1, DIM)),
        "res3_w2": w((DIM, DIM)), "res3_b2": w((1, DIM)),
        # x_edge_mlp: MLP([3*dim, dim]); weight split into 3 dim x dim chunks
        "xe_w1": w((DIM, DIM)), "xe_w2": w((DIM, DIM)), "xe_w3": w((DIM, DIM)),
        "xe_b": w((1, DIM)),
        # linear: Linear(dim, dim, bias=False)
        "lin_w": w((DIM, DIM)),
    }

    h = jax.random.normal(next(ki), (N, DIM), dtype=jnp.float32)
    edge_attr = jax.random.normal(next(ki), (E, DIM), dtype=jnp.float32)
    edge_index = jax.random.randint(next(ki), (2, E), 0, N, dtype=jnp.int32)

    out = jax.jit(global_mp_forward)(h, edge_attr, edge_index, params)
    out = jax.block_until_ready(out)

    ref = _ref_forward(h, edge_attr, edge_index, params)
    assert out.shape == (N, DIM) and out.dtype == jnp.float32
    # f32 MXU path; observed error is ~1e-6, tolerance kept loose for safety.
    np.testing.assert_allclose(np.asarray(out), np.asarray(ref),
                               rtol=1e-3, atol=1e-3)

    print("KERNEL_OK")
</pallas_src>

<mosaic_0001>
module attributes {stable_mosaic.version = 11 : i64} {
  func.func @global_mp_kernel(%arg0: memref<16x1xi32, #tpu.memory_space<vmem>>, %arg1: memref<16x1xi32, #tpu.memory_space<vmem>>, %arg2: memref<8x128xf32, #tpu.memory_space<vmem>>, %arg3: memref<16x128xf32, #tpu.memory_space<vmem>>, %arg4: memref<10x128x128xf32, #tpu.memory_space<vmem>>, %arg5: memref<9x128xf32, #tpu.memory_space<vmem>>, %arg6: memref<256x128xf32, #tpu.memory_space<vmem>>, %arg7: memref<8x128xf32, #tpu.memory_space<vmem>>) attributes {dimension_semantics = [], scalar_prefetch = 0 : i64, scratch_operands = 0 : i64, tpu.core_type = #tpu.core_type<tc>} {
    %c0 = arith.constant 0 : index
    %c0_0 = arith.constant 0 : index
    %0 = vector.load %arg2[%c0, %c0_0] : memref<8x128xf32, #tpu.memory_space<vmem>>, vector<8x128xf32>
    %c0_1 = arith.constant 0 : index
    %c0_2 = arith.constant 0 : index
    %1 = vector.load %arg3[%c0_1, %c0_2] : memref<16x128xf32, #tpu.memory_space<vmem>>, vector<16x128xf32>
    %2 = tpu.iota {dimensions = array<i32: 1>} : vector<16x8xi32>
    %c0_3 = arith.constant 0 : index
    %c0_4 = arith.constant 0 : index
    %3 = vector.load %arg0[%c0_3, %c0_4] : memref<16x1xi32, #tpu.memory_space<vmem>>, vector<16x1xi32>
    %4 = vector.broadcast %3 : vector<16x1xi32> to vector<16x8xi32>
    %5 = arith.cmpi eq, %2, %4 : vector<16x8xi32>
    %6 = arith.extui %5 : vector<16x8xi1> to vector<16x8xi32>
    %7 = arith.sitofp %6 : vector<16x8xi32> to vector<16x8xf32>
    %c0_5 = arith.constant 0 : index
    %c0_6 = arith.constant 0 : index
    %8 = vector.load %arg1[%c0_5, %c0_6] : memref<16x1xi32, #tpu.memory_space<vmem>>, vector<16x1xi32>
    %9 = vector.broadcast %8 : vector<16x1xi32> to vector<16x8xi32>
    %10 = arith.cmpi eq, %2, %9 : vector<16x8xi32>
    %11 = arith.extui %10 : vector<16x8xi1> to vector<16x8xi32>
    %12 = arith.sitofp %11 : vector<16x8xi32> to vector<16x8xf32>
    %c1 = arith.constant 1 : index
    %c0_7 = arith.constant 0 : index
    %c0_8 = arith.constant 0 : index
    %13 = vector.load %arg4[%c1, %c0_7, %c0_8] : memref<10x128x128xf32, #tpu.memory_space<vmem>>, vector<1x128x128xf32>
    %14 = vector.shape_cast %13 : vector<1x128x128xf32> to vector<128x128xf32>
    %cst = arith.constant dense<0.000000e+00> : vector<16x128xf32>
    %15 = tpu.matmul %1, %14, %cst {dimension_numbers = #tpu.dot_dimension_numbers<[1], [0], [0], [1], [0, 0, 1, 1], [], []>} : vector<16x128xf32>, vector<128x128xf32>, vector<16x128xf32> -> vector<16x128xf32>
    %c9 = arith.constant 9 : index
    %c0_9 = arith.constant 0 : index
    %c0_10 = arith.constant 0 : index
    %16 = vector.load %arg4[%c9, %c0_9, %c0_10] : memref<10x128x128xf32, #tpu.memory_space<vmem>>, vector<1x128x128xf32>
    %17 = vector.shape_cast %16 : vector<1x128x128xf32> to vector<128x128xf32>
    %cst_11 = arith.constant dense<0.000000e+00> : vector<16x128xf32>
    %18 = tpu.matmul %1, %17, %cst_11 {dimension_numbers = #tpu.dot_dimension_numbers<[1], [0], [0], [1], [0, 0, 1, 1], [], []>} : vector<16x128xf32>, vector<128x128xf32>, vector<16x128xf32> -> vector<16x128xf32>
    %c1_12 = arith.constant 1 : index
    %c0_13 = arith.constant 0 : index
    %19 = vector.load %arg5[%c1_12, %c0_13] : memref<9x128xf32, #tpu.memory_space<vmem>>, vector<1x128xf32>
    %20 = vector.broadcast %19 : vector<1x128xf32> to vector<16x128xf32>
    %21 = arith.addf %18, %20 : vector<16x128xf32>
    %c0_14 = arith.constant 0 : index
    %c0_15 = arith.constant 0 : index
    %c0_16 = arith.constant 0 : index
    %22 = vector.load %arg4[%c0_14, %c0_15, %c0_16] : memref<10x128x128xf32, #tpu.memory_space<vmem>>, vector<1x128x128xf32>
    %23 = vector.shape_cast %22 : vector<1x128x128xf32> to vector<128x128xf32>
    %cst_17 = arith.constant dense<0.000000e+00> : vector<8x128xf32>
    %24 = tpu.matmul %0, %23, %cst_17 {dimension_numbers = #tpu.dot_dimension_numbers<[1], [0], [0], [1], [0, 0, 1, 1], [], []>} : vector<8x128xf32>, vector<128x128xf32>, vector<8x128xf32> -> vector<8x128xf32>
    %c0_18 = arith.constant 0 : index
    %c0_19 = arith.constant 0 : index
    %25 = vector.load %arg5[%c0_18, %c0_19] : memref<9x128xf32, #tpu.memory_space<vmem>>, vector<1x128xf32>
    %26 = vector.broadcast %25 : vector<1x128xf32> to vector<8x128xf32>
    %27 = arith.addf %24, %26 : vector<8x128xf32>
    %28 = arith.negf %27 : vector<8x128xf32>
    %29 = math.exp %28 : vector<8x128xf32>
    %cst_20 = arith.constant 1.000000e+00 : f32
    %30 = vector.broadcast %cst_20 : f32 to vector<8x128xf32>
    %31 = arith.addf %30, %29 : vector<8x128xf32>
    %32 = arith.divf %30, %31 : vector<8x128xf32>
    %33 = arith.mulf %27, %32 : vector<8x128xf32>
    %cst_21 = arith.constant dense<0.000000e+00> : vector<16x128xf32>
    %34 = tpu.matmul %7, %33, %cst_21 {dimension_numbers = #tpu.dot_dimension_numbers<[1], [0], [0], [1], [0, 0, 1, 1], [], []>} : vector<16x8xf32>, vector<8x128xf32>, vector<16x128xf32> -> vector<16x128xf32>
    %cst_22 = arith.constant dense<0.000000e+00> : vector<16x128xf32>
    %35 = tpu.matmul %12, %33, %cst_22 {dimension_numbers = #tpu.dot_dimension_numbers<[1], [0], [0], [1], [0, 0, 1, 1], [], []>} : vector<16x8xf32>, vector<8x128xf32>, vector<16x128xf32> -> vector<16x128xf32>
    %36 = tpu.concatenate %34, %35 in 1 : vector<16x128xf32>, vector<16x128xf32> -> vector<16x256xf32>
    %c0_23 = arith.constant 0 : index
    %c0_24 = arith.constant 0 : index
    %37 = vector.load %arg6[%c0_23, %c0_24] : memref<256x128xf32, #tpu.memory_space<vmem>>, vector<256x128xf32>
    %cst_25 = arith.constant dense<0.000000e+00> : vector<16x128xf32>
    %38 = tpu.matmul %36, %37, %cst_25 {dimension_numbers = #tpu.dot_dimension_numbers<[1], [0], [0], [1], [0, 0, 1, 1], [], []>} : vector<16x256xf32>, vector<256x128xf32>, vector<16x128xf32> -> vector<16x128xf32>
    %39 = arith.addf %38, %21 : vector<16x128xf32>
    %40 = arith.negf %39 : vector<16x128xf32>
    %41 = math.exp %40 : vector<16x128xf32>
    %cst_26 = arith.constant 1.000000e+00 : f32
    %42 = vector.broadcast %cst_26 : f32 to vector<16x128xf32>
    %43 = arith.addf %42, %41 : vector<16x128xf32>
    %44 = arith.divf %42, %43 : vector<16x128xf32>
    %45 = arith.mulf %39, %44 : vector<16x128xf32>
    %46 = arith.mulf %15, %45 : vector<16x128xf32>
    %cst_27 = arith.constant dense<0.000000e+00> : vector<8x128xf32>
    %47 = tpu.matmul %7, %46, %cst_27 {dimension_numbers = #tpu.dot_dimension_numbers<[0], [0], [1], [1], [0, 1, 1, 1], [], []>} : vector<16x8xf32>, vector<16x128xf32>, vector<8x128xf32> -> vector<8x128xf32>
    %48 = arith.addf %47, %33 : vector<8x128xf32>
    %c3 = arith.constant 3 : index
    %c0_28 = arith.constant 0 : index
    %c0_29 = arith.constant 0 : index
    %49 = vector.load %arg4[%c3, %c0_28, %c0_29] : memref<10x128x128xf32, #tpu.memory_space<vmem>>, vector<1x128x128xf32>
    %50 = vector.shape_cast %49 : vector<1x128x128xf32> to vector<128x128xf32>
    %cst_30 = arith.constant dense<0.000000e+00> : vector<8x128xf32>
    %51 = tpu.matmul %48, %50, %cst_30 {dimension_numbers = #tpu.dot_dimension_numbers<[1], [0], [0], [1], [0, 0, 1, 1], [], []>} : vector<8x128xf32>, vector<128x128xf32>, vector<8x128xf32> -> vector<8x128xf32>
    %c3_31 = arith.constant 3 : index
    %c0_32 = arith.constant 0 : index
    %52 = vector.load %arg5[%c3_31, %c0_32] : memref<9x128xf32, #tpu.memory_space<vmem>>, vector<1x128xf32>
    %53 = vector.broadcast %52 : vector<1x128xf32> to vector<8x128xf32>
    %54 = arith.addf %51, %53 : vector<8x128xf32>
    %55 = arith.negf %54 : vector<8x128xf32>
    %56 = math.exp %55 : vector<8x128xf32>
    %cst_33 = arith.constant 1.000000e+00 : f32
    %57 = vector.broadcast %cst_33 : f32 to vector<8x128xf32>
    %58 = arith.addf %57, %56 : vector<8x128xf32>
    %59 = arith.divf %57, %58 : vector<8x128xf32>
    %60 = arith.mulf %54, %59 : vector<8x128xf32>
    %c4 = arith.constant 4 : index
    %c0_34 = arith.constant 0 : index
    %c0_35 = arith.constant 0 : index
    %61 = vector.load %arg4[%c4, %c0_34, %c0_35] : memref<10x128x128xf32, #tpu.memory_space<vmem>>, vector<1x128x128xf32>
    %62 = vector.shape_cast %61 : vector<1x128x128xf32> to vector<128x128xf32>
    %cst_36 = arith.constant dense<0.000000e+00> : vector<8x128xf32>
    %63 = tpu.matmul %60, %62, %cst_36 {dimension_numbers = #tpu.dot_dimension_numbers<[1], [0], [0], [1], [0, 0, 1, 1], [], []>} : vector<8x128xf32>, vector<128x128xf32>, vector<8x128xf32> -> vector<8x128xf32>
    %c4_37 = arith.constant 4 : index
    %c0_38 = arith.constant 0 : index
    %64 = vector.load %arg5[%c4_37, %c0_38] : memref<9x128xf32, #tpu.memory_space<vmem>>, vector<1x128xf32>
    %65 = vector.broadcast %64 : vector<1x128xf32> to vector<8x128xf32>
    %66 = arith.addf %63, %65 : vector<8x128xf32>
    %67 = arith.negf %66 : vector<8x128xf32>
    %68 = math.exp %67 : vector<8x128xf32>
    %cst_39 = arith.constant 1.000000e+00 : f32
    %69 = vector.broadcast %cst_39 : f32 to vector<8x128xf32>
    %70 = arith.addf %69, %68 : vector<8x128xf32>
    %71 = arith.divf %69, %70 : vector<8x128xf32>
    %72 = arith.mulf %66, %71 : vector<8x128xf32>
    %73 = arith.addf %72, %48 : vector<8x128xf32>
    %c2 = arith.constant 2 : index
    %c0_40 = arith.constant 0 : index
    %c0_41 = arith.constant 0 : index
    %74 = vector.load %arg4[%c2, %c0_40, %c0_41] : memref<10x128x128xf32, #tpu.memory_space<vmem>>, vector<1x128x128xf32>
    %75 = vector.shape_cast %74 : vector<1x128x128xf32> to vector<128x128xf32>
    %cst_42 = arith.constant dense<0.000000e+00> : vector<8x128xf32>
    %76 = tpu.matmul %73, %75, %cst_42 {dimension_numbers = #tpu.dot_dimension_numbers<[1], [0], [0], [1], [0, 0, 1, 1], [], []>} : vector<8x128xf32>, vector<128x128xf32>, vector<8x128xf32> -> vector<8x128xf32>
    %c2_43 = arith.constant 2 : index
    %c0_44 = arith.constant 0 : index
    %77 = vector.load %arg5[%c2_43, %c0_44] : memref<9x128xf32, #tpu.memory_space<vmem>>, vector<1x128xf32>
    %78 = vector.broadcast %77 : vector<1x128xf32> to vector<8x128xf32>
    %79 = arith.addf %76, %78 : vector<8x128xf32>
    %80 = arith.negf %79 : vector<8x128xf32>
    %81 = math.exp %80 : vector<8x128xf32>
    %cst_45 = arith.constant 1.000000e+00 : f32
    %82 = vector.broadcast %cst_45 : f32 to vector<8x128xf32>
    %83 = arith.addf %82, %81 : vector<8x128xf32>
    %84 = arith.divf %82, %83 : vector<8x128xf32>
    %85 = arith.mulf %79, %84 : vector<8x128xf32>
    %86 = arith.addf %85, %0 : vector<8x128xf32>
    %c5 = arith.constant 5 : index
    %c0_46 = arith.constant 0 : index
    %c0_47 = arith.constant 0 : index
    %87 = vector.load %arg4[%c5, %c0_46, %c0_47] : memref<10x128x128xf32, #tpu.memory_space<vmem>>, vector<1x128x128xf32>
    %88 = vector.shape_cast %87 : vector<1x128x128xf32> to vector<128x128xf32>
    %cst_48 = arith.constant dense<0.000000e+00> : vector<8x128xf32>
    %89 = tpu.matmul %86, %88, %cst_48 {dimension_numbers = #tpu.dot_dimension_numbers<[1], [0], [0], [1], [0, 0, 1, 1], [], []>} : vector<8x128xf32>, vector<128x128xf32>, vector<8x128xf32> -> vector<8x128xf32>
    %c5_49 = arith.constant 5 : index
    %c0_50 = arith.constant 0 : index
    %90 = vector.load %arg5[%c5_49, %c0_50] : memref<9x128xf32, #tpu.memory_space<vmem>>, vector<1x128xf32>
    %91 = vector.broadcast %90 : vector<1x128xf32> to vector<8x128xf32>
    %92 = arith.addf %89, %91 : vector<8x128xf32>
    %93 = arith.negf %92 : vector<8x128xf32>
    %94 = math.exp %93 : vector<8x128xf32>
    %cst_51 = arith.constant 1.000000e+00 : f32
    %95 = vector.broadcast %cst_51 : f32 to vector<8x128xf32>
    %96 = arith.addf %95, %94 : vector<8x128xf32>
    %97 = arith.divf %95, %96 : vector<8x128xf32>
    %98 = arith.mulf %92, %97 : vector<8x128xf32>
    %c6 = arith.constant 6 : index
    %c0_52 = arith.constant 0 : index
    %c0_53 = arith.constant 0 : index
    %99 = vector.load %arg4[%c6, %c0_52, %c0_53] : memref<10x128x128xf32, #tpu.memory_space<vmem>>, vector<1x128x128xf32>
    %100 = vector.shape_cast %99 : vector<1x128x128xf32> to vector<128x128xf32>
    %cst_54 = arith.constant dense<0.000000e+00> : vector<8x128xf32>
    %101 = tpu.matmul %98, %100, %cst_54 {dimension_numbers = #tpu.dot_dimension_numbers<[1], [0], [0], [1], [0, 0, 1, 1], [], []>} : vector<8x128xf32>, vector<128x128xf32>, vector<8x128xf32> -> vector<8x128xf32>
    %c6_55 = arith.constant 6 : index
    %c0_56 = arith.constant 0 : index
    %102 = vector.load %arg5[%c6_55, %c0_56] : memref<9x128xf32, #tpu.memory_space<vmem>>, vector<1x128xf32>
    %103 = vector.broadcast %102 : vector<1x128xf32> to vector<8x128xf32>
    %104 = arith.addf %101, %103 : vector<8x128xf32>
    %105 = arith.negf %104 : vector<8x128xf32>
    %106 = math.exp %105 : vector<8x128xf32>
    %cst_57 = arith.constant 1.000000e+00 : f32
    %107 = vector.broadcast %cst_57 : f32 to vector<8x128xf32>
    %108 = arith.addf %107, %106 : vector<8x128xf32>
    %109 = arith.divf %107, %108 : vector<8x128xf32>
    %110 = arith.mulf %104, %109 : vector<8x128xf32>
    %111 = arith.addf %110, %86 : vector<8x128xf32>
    %c7 = arith.constant 7 : index
    %c0_58 = arith.constant 0 : index
    %c0_59 = arith.constant 0 : index
    %112 = vector.load %arg4[%c7, %c0_58, %c0_59] : memref<10x128x128xf32, #tpu.memory_space<vmem>>, vector<1x128x128xf32>
    %113 = vector.shape_cast %112 : vector<1x128x128xf32> to vector<128x128xf32>
    %cst_60 = arith.constant dense<0.000000e+00> : vector<8x128xf32>
    %114 = tpu.matmul %111, %113, %cst_60 {dimension_numbers = #tpu.dot_dimension_numbers<[1], [0], [0], [1], [0, 0, 1, 1], [], []>} : vector<8x128xf32>, vector<128x128xf32>, vector<8x128xf32> -> vector<8x128xf32>
    %c7_61 = arith.constant 7 : index
    %c0_62 = arith.constant 0 : index
    %115 = vector.load %arg5[%c7_61, %c0_62] : memref<9x128xf32, #tpu.memory_space<vmem>>, vector<1x128xf32>
    %116 = vector.broadcast %115 : vector<1x128xf32> to vector<8x128xf32>
    %117 = arith.addf %114, %116 : vector<8x128xf32>
    %118 = arith.negf %117 : vector<8x128xf32>
    %119 = math.exp %118 : vector<8x128xf32>
    %cst_63 = arith.constant 1.000000e+00 : f32
    %120 = vector.broadcast %cst_63 : f32 to vector<8x128xf32>
    %121 = arith.addf %120, %119 : vector<8x128xf32>
    %122 = arith.divf %120, %121 : vector<8x128xf32>
    %123 = arith.mulf %117, %122 : vector<8x128xf32>
    %c8 = arith.constant 8 : index
    %c0_64 = arith.constant 0 : index
    %c0_65 = arith.constant 0 : index
    %124 = vector.load %arg4[%c8, %c0_64, %c0_65] : memref<10x128x128xf32, #tpu.memory_space<vmem>>, vector<1x128x128xf32>
    %125 = vector.shape_cast %124 : vector<1x128x128xf32> to vector<128x128xf32>
    %cst_66 = arith.constant dense<0.000000e+00> : vector<8x128xf32>
    %126 = tpu.matmul %123, %125, %cst_66 {dimension_numbers = #tpu.dot_dimension_numbers<[1], [0], [0], [1], [0, 0, 1, 1], [], []>} : vector<8x128xf32>, vector<128x128xf32>, vector<8x128xf32> -> vector<8x128xf32>
    %c8_67 = arith.constant 8 : index
    %c0_68 = arith.constant 0 : index
    %127 = vector.load %arg5[%c8_67, %c0_68] : memref<9x128xf32, #tpu.memory_space<vmem>>, vector<1x128xf32>
    %128 = vector.broadcast %127 : vector<1x128xf32> to vector<8x128xf32>
    %129 = arith.addf %126, %128 : vector<8x128xf32>
    %130 = arith.negf %129 : vector<8x128xf32>
    %131 = math.exp %130 : vector<8x128xf32>
    %cst_69 = arith.constant 1.000000e+00 : f32
    %132 = vector.broadcast %cst_69 : f32 to vector<8x128xf32>
    %133 = arith.addf %132, %131 : vector<8x128xf32>
    %134 = arith.divf %132, %133 : vector<8x128xf32>
    %135 = arith.mulf %129, %134 : vector<8x128xf32>
    %136 = arith.addf %135, %111 : vector<8x128xf32>
    %cst_70 = arith.constant dense<0.000000e+00> : vector<16x128xf32>
    %137 = tpu.matmul %7, %136, %cst_70 {dimension_numbers = #tpu.dot_dimension_numbers<[1], [0], [0], [1], [0, 0, 1, 1], [], []>} : vector<16x8xf32>, vector<8x128xf32>, vector<16x128xf32> -> vector<16x128xf32>
    %cst_71 = arith.constant dense<0.000000e+00> : vector<16x128xf32>
    %138 = tpu.matmul %12, %136, %cst_71 {dimension_numbers = #tpu.dot_dimension_numbers<[1], [0], [0], [1], [0, 0, 1, 1], [], []>} : vector<16x8xf32>, vector<8x128xf32>, vector<16x128xf32> -> vector<16x128xf32>
    %139 = tpu.concatenate %137, %138 in 1 : vector<16x128xf32>, vector<16x128xf32> -> vector<16x256xf32>
    %c0_72 = arith.constant 0 : index
    %c0_73 = arith.constant 0 : index
    %140 = vector.load %arg6[%c0_72, %c0_73] : memref<256x128xf32, #tpu.memory_space<vmem>>, vector<256x128xf32>
    %cst_74 = arith.constant dense<0.000000e+00> : vector<16x128xf32>
    %141 = tpu.matmul %139, %140, %cst_74 {dimension_numbers = #tpu.dot_dimension_numbers<[1], [0], [0], [1], [0, 0, 1, 1], [], []>} : vector<16x256xf32>, vector<256x128xf32>, vector<16x128xf32> -> vector<16x128xf32>
    %142 = arith.addf %141, %21 : vector<16x128xf32>
    %143 = arith.negf %142 : vector<16x128xf32>
    %144 = math.exp %143 : vector<16x128xf32>
    %cst_75 = arith.constant 1.000000e+00 : f32
    %145 = vector.broadcast %cst_75 : f32 to vector<16x128xf32>
    %146 = arith.addf %145, %144 : vector<16x128xf32>
    %147 = arith.divf %145, %146 : vector<16x128xf32>
    %148 = arith.mulf %142, %147 : vector<16x128xf32>
    %149 = arith.mulf %15, %148 : vector<16x128xf32>
    %cst_76 = arith.constant dense<0.000000e+00> : vector<8x128xf32>
    %150 = tpu.matmul %7, %149, %cst_76 {dimension_numbers = #tpu.dot_dimension_numbers<[0], [0], [1], [1], [0, 1, 1, 1], [], []>} : vector<16x8xf32>, vector<16x128xf32>, vector<8x128xf32> -> vector<8x128xf32>
    %151 = arith.addf %150, %136 : vector<8x128xf32>
    %c0_77 = arith.constant 0 : index
    %c0_78 = arith.constant 0 : index
    %152 = vector.load %arg7[%c0_77, %c0_78] : memref<8x128xf32, #tpu.memory_space<vmem>>, vector<8x128xf32>
    tpu.vector_store %arg7[%c0_77, %c0_78], %151 {strides = array<i32>} : memref<8x128xf32, #tpu.memory_space<vmem>>, vector<8x128xf32>,
    return
  }
}

</mosaic_0001>

<llo_original>
// kernel: global_mp_forward.1
$region0: #{global_mp_forward.1}
  #allocation0 [shape = 'u32[]', space=smem, size = 0x4, offset = 0x4, fixed_abs, tag = 'smem constant byte address 0x4 - core index']
  #allocation1 [shape = 'u32[144,128]{1,0:T(1,128)}', space=vmem, size = 0x12000, scoped, tag = 'internal scratch']
  %s0 = inlined_call_operand.vmem [shape: s32[16,1], index: 0, kind: input, shape index: {}]
  %s1 = inlined_call_operand.vmem [shape: s32[16,1], index: 1, kind: input, shape index: {}]
  %s2 = inlined_call_operand.vmem [shape: f32[8,128], index: 2, kind: input, shape index: {}]
  %s3 = inlined_call_operand.vmem [shape: f32[16,128], index: 3, kind: input, shape index: {}]
  %s4 = inlined_call_operand.vmem [shape: f32[10,128,128], index: 4, kind: input, shape index: {}]
  %s5 = inlined_call_operand.vmem [shape: f32[9,128], index: 5, kind: input, shape index: {}]
  %s6 = inlined_call_operand.vmem [shape: f32[256,128], index: 6, kind: input, shape index: {}]
  %s7 = inlined_call_operand.hbm [shape: f32[8,128], index: 7, kind: output, shape index: {}]
  %s8 = sld [smem:[#allocation0]]
  $region38: #{global_mp_forward.1} parent=0
    _
  %s10 = ssub.s32 1, %s8
  %s11 = scalar_select 0, %s10, %s8
  $region1: #{global_mp_forward.1} parent=0
    #allocation2 [shape = 'u8[4096]{0}', space=vmem, size = 0x1000, scoped, tag = 'output window, operand 0, single buffered']
    #allocation3 [shape = 's32[1]{0}', space=sflag, size = 0x4, scoped, tag = 'scoped memory for global_mp_forward.1']
    %12 = vsyncpa [#allocation3], 0
    // Predicated region
    $region2: #{global_mp_forward.1} parent=1 // pred_check
      _
    $region3: #{global_mp_forward.1} parent=1 // pred_check_branch
      %14 = sbr.rel (0) target = $region5
    $region4: #{global_mp_forward.1} parent=1 // pred_region
      _
    $region5: #{global_mp_forward.1} parent=1 // pred_fallthru
      _
    // Predicated region
    $region6: #{global_mp_forward.1} parent=1 // pred_check
      _
    $region7: #{global_mp_forward.1} parent=1 // pred_check_branch
      %16 = sbr.rel (0) target = $region9
    $region8: #{global_mp_forward.1} parent=1 // pred_region
      _
    $region9: #{global_mp_forward.1} parent=1 // pred_fallthru
      _
    // Predicated region
    $region10: #{global_mp_forward.1} parent=1 // pred_check
      _
    $region11: #{global_mp_forward.1} parent=1 // pred_check_branch
      %18 = sbr.rel (0) target = $region13
    $region12: #{global_mp_forward.1} parent=1 // pred_region
      _
    $region13: #{global_mp_forward.1} parent=1 // pred_fallthru
      _
    // Predicated region
    $region14: #{global_mp_forward.1} parent=1 // pred_check
      _
    $region15: #{global_mp_forward.1} parent=1 // pred_check_branch
      %20 = sbr.rel (0) target = $region17
    $region16: #{global_mp_forward.1} parent=1 // pred_region
      _
    $region17: #{global_mp_forward.1} parent=1 // pred_fallthru
      _
    // Predicated region
    $region18: #{global_mp_forward.1} parent=1 // pred_check
      _
    $region19: #{global_mp_forward.1} parent=1 // pred_check_branch
      %22 = sbr.rel (0) target = $region21
    $region20: #{global_mp_forward.1} parent=1 // pred_region
      _
    $region21: #{global_mp_forward.1} parent=1 // pred_fallthru
      _
    // Predicated region
    $region22: #{global_mp_forward.1} parent=1 // pred_check
      _
    $region23: #{global_mp_forward.1} parent=1 // pred_check_branch
      %24 = sbr.rel (0) target = $region25
    $region24: #{global_mp_forward.1} parent=1 // pred_region
      _
    $region25: #{global_mp_forward.1} parent=1 // pred_fallthru
      _
    // Predicated region
    $region26: #{global_mp_forward.1} parent=1 // pred_check
      _
    $region27: #{global_mp_forward.1} parent=1 // pred_check_branch
      %26 = sbr.rel (0) target = $region29
    $region28: #{global_mp_forward.1} parent=1 // pred_region
      _
    $region29: #{global_mp_forward.1} parent=1 // pred_fallthru
      _
    %v27 = vld [vmem:[%s2] sm:$0xff]
    %v28 = vld [vmem:[%s3] sm:$0xff]
    %v29 = vld [vmem:[%s3 + $0x8] sm:$0xff]
    %v30 = vlaneseq
    %v31 = vand.u32 %v30, 127
    %v32 = vld [vmem:[%s0] sm:$0xff]
    %v33 = vld [vmem:[%s0 + $0x8] sm:$0xff]
    %34 = vset.pattern.permute.xlu0 0
    %35 = vperm.xlu0 %34, %v32
    %v36 = vpop.permute.xlu0 %35
    %37 = vset.pattern.permute.xlu0 0
    %38 = vperm.xlu0 %37, %v33
    %v39 = vpop.permute.xlu0 %38
    %vm40 = vcmp.eq.s32.totalorder %v31, %v36
    %vm41 = vcmp.eq.s32.totalorder %v31, %v39
    %v42 = vsel %vm40, 1, 0
    %v43 = vsel %vm41, 1, 0
    %v44 = vcvt.s32.f32 %v42
    %v45 = vcvt.s32.f32 %v43
    %v46 = vld [vmem:[%s1] sm:$0xff]
    %v47 = vld [vmem:[%s1 + $0x8] sm:$0xff]
    %48 = vset.pattern.permute.xlu0 0
    %49 = vperm.xlu0 %48, %v46
    %v50 = vpop.permute.xlu0 %49
    %51 = vset.pattern.permute.xlu0 0
    %52 = vperm.xlu0 %51, %v47
    %v53 = vpop.permute.xlu0 %52
    %vm54 = vcmp.eq.s32.totalorder %v31, %v50
    %vm55 = vcmp.eq.s32.totalorder %v31, %v53
    %v56 = vsel %vm54, 1, 0
    %v57 = vsel %vm55, 1, 0
    %v58 = vcvt.s32.f32 %v56
    %v59 = vcvt.s32.f32 %v57
    %s60 = scalar_lea.vmem %s4, 128
    %v61 = vld [vmem:[%s60] sm:$0xff]
    %v62 = vld [vmem:[%s60 + $0x8] sm:$0xff]
    %v63 = vld [vmem:[%s60 + $0x10] sm:$0xff]
    %v64 = vld [vmem:[%s60 + $0x18] sm:$0xff]
    %v65 = vld [vmem:[%s60 + $0x20] sm:$0xff]
    %v66 = vld [vmem:[%s60 + $0x28] sm:$0xff]
    %v67 = vld [vmem:[%s60 + $0x30] sm:$0xff]
    %v68 = vld [vmem:[%s60 + $0x38] sm:$0xff]
    %v69 = vld [vmem:[%s60 + $0x40] sm:$0xff]
    %v70 = vld [vmem:[%s60 + $0x48] sm:$0xff]
    %v71 = vld [vmem:[%s60 + $0x50] sm:$0xff]
    %v72 = vld [vmem:[%s60 + $0x58] sm:$0xff]
    %v73 = vld [vmem:[%s60 + $0x60] sm:$0xff]
    %v74 = vld [vmem:[%s60 + $0x68] sm:$0xff]
    %v75 = vld [vmem:[%s60 + $0x70] sm:$0xff]
    %v76 = vld [vmem:[%s60 + $0x78] sm:$0xff]
    %77 = vmatprep.subr.mxu0 0.0
    %78 = vmatpush1.msra.mxu0 %v61
    %79 = vmatprep.subr.mxu0 0.0
    %80 = vmatpush1.msra.mxu0 %v62
    %81 = vmatprep.subr.mxu0 0.0
    %82 = vmatpush1.msra.mxu0 %v63
    %83 = vmatprep.subr.mxu0 0.0
    %84 = vmatpush1.msra.mxu0 %v64
    %85 = vmatprep.subr.mxu0 0.0
    %86 = vmatpush1.msra.mxu0 %v65
    %87 = vmatprep.subr.mxu0 0.0
    %88 = vmatpush1.msra.mxu0 %v66
    %89 = vmatprep.subr.mxu0 0.0
    %90 = vmatpush1.msra.mxu0 %v67
    %91 = vmatprep.subr.mxu0 0.0
    %92 = vmatpush1.msra.mxu0 %v68
    %93 = vmatprep.subr.mxu0 0.0
    %94 = vmatpush1.msra.mxu0 %v69
    %95 = vmatprep.subr.mxu0 0.0
    %96 = vmatpush1.msra.mxu0 %v70
    %97 = vmatprep.subr.mxu0 0.0
    %98 = vmatpush1.msra.mxu0 %v71
    %99 = vmatprep.subr.mxu0 0.0
    %100 = vmatpush1.msra.mxu0 %v72
    %101 = vmatprep.subr.mxu0 0.0
    %102 = vmatpush1.msra.mxu0 %v73
    %103 = vmatprep.subr.mxu0 0.0
    %104 = vmatpush1.msra.mxu0 %v74
    %105 = vmatprep.subr.mxu0 0.0
    %106 = vmatpush1.msra.mxu0 %v75
    %107 = vmatprep.subr.mxu0 0.0
    %108 = vmatpush1.msra.mxu0 %v76
    %109 = vmatprep.subr.mxu0 0.0
    %110 = vmatpush1.msra.mxu0 0.0
    %111 = vmatprep.subr.mxu0 0.0
    %112 = vmatpush1.msra.mxu0 0.0
    %113 = vmatprep.subr.mxu0 0.0
    %114 = vmatpush1.msra.mxu0 0.0
    %115 = vmatprep.subr.mxu0 0.0
    %116 = vmatpush1.msra.mxu0 0.0
    %117 = vmatprep.subr.mxu0 0.0
    %118 = vmatpush1.msra.mxu0 0.0
    %119 = vmatprep.subr.mxu0 0.0
    %120 = vmatpush1.msra.mxu0 0.0
    %121 = vmatprep.subr.mxu0 0.0
    %122 = vmatpush1.msra.mxu0 0.0
    %123 = vmatprep.subr.mxu0 0.0
    %124 = vmatpush1.msra.mxu0 0.0
    %125 = vmatprep.subr.mxu0 0.0
    %126 = vmatpush1.msra.mxu0 0.0
    %127 = vmatprep.subr.mxu0 0.0
    %128 = vmatpush1.msra.mxu0 0.0
    %129 = vmatprep.subr.mxu0 0.0
    %130 = vmatpush1.msra.mxu0 0.0
    %131 = vmatprep.subr.mxu0 0.0
    %132 = vmatpush1.msra.mxu0 0.0
    %133 = vmatprep.subr.mxu0 0.0
    %134 = vmatpush1.msra.mxu0 0.0
    %135 = vmatprep.subr.mxu0 0.0
    %136 = vmatpush1.msra.mxu0 0.0
    %137 = vmatprep.subr.mxu0 0.0
    %138 = vmatpush1.msra.mxu0 0.0
    %139 = vmatprep.subr.mxu0 0.0
    %140 = vmatpush1.msra.mxu0 0.0
    %141 = vmatprep.mubr.f32.mxu0 0.0
    %142 = vmatmul.mubr.f32.gmra.mrb[0].mxu0 %v28
    %v143 = vpop.f32.mrb[0].mxu0
    %v144 = vadd.f32 0.0, %v143
    %v145 = vpop.f32.mrb[0].mxu0
    %146 = vmatprep.mubr.f32.mxu0 0.0
    %147 = vmatmul.mubr.f32.gmra.mrb[0].mxu0 %v29
    %v148 = vpop.f32.mrb[0].mxu0
    %v149 = vadd.f32 0.0, %v148
    %v150 = vpop.f32.mrb[0].mxu0
    %151 = vdwg.mxu0
    %s152 = scalar_lea.vmem %s4, 1152
    %v153 = vld [vmem:[%s152] sm:$0xff]
    %v154 = vld [vmem:[%s152 + $0x8] sm:$0xff]
    %v155 = vld [vmem:[%s152 + $0x10] sm:$0xff]
    %v156 = vld [vmem:[%s152 + $0x18] sm:$0xff]
    %v157 = vld [vmem:[%s152 + $0x20] sm:$0xff]
    %v158 = vld [vmem:[%s152 + $0x28] sm:$0xff]
    %v159 = vld [vmem:[%s152 + $0x30] sm:$0xff]
    %v160 = vld [vmem:[%s152 + $0x38] sm:$0xff]
    %v161 = vld [vmem:[%s152 + $0x40] sm:$0xff]
    %v162 = vld [vmem:[%s152 + $0x48] sm:$0xff]
    %v163 = vld [vmem:[%s152 + $0x50] sm:$0xff]
    %v164 = vld [vmem:[%s152 + $0x58] sm:$0xff]
    %v165 = vld [vmem:[%s152 + $0x60] sm:$0xff]
    %v166 = vld [vmem:[%s152 + $0x68] sm:$0xff]
    %v167 = vld [vmem:[%s152 + $0x70] sm:$0xff]
    %v168 = vld [vmem:[%s152 + $0x78] sm:$0xff]
    %v169 = vld [vmem:[%s5 + $0x1] sm:$0x1]
    %v170 = vlaneseq
    %v171 = vshrl.u32 %v170, 7
    %v172 = vsub.s32 0, %v171
    %v173 = vrot.slane %v169, %v172
    %174 = vmatprep.subr.mxu0 0.0
    %175 = vmatpush1.msra.mxu0 %v153
    %176 = vmatprep.subr.mxu0 0.0
    %177 = vmatpush1.msra.mxu0 %v154
    %178 = vmatprep.subr.mxu0 0.0
    %179 = vmatpush1.msra.mxu0 %v155
    %180 = vmatprep.subr.mxu0 0.0
    %181 = vmatpush1.msra.mxu0 %v156
    %182 = vmatprep.subr.mxu0 0.0
    %183 = vmatpush1.msra.mxu0 %v157
    %184 = vmatprep.subr.mxu0 0.0
    %185 = vmatpush1.msra.mxu0 %v158
    %186 = vmatprep.subr.mxu0 0.0
    %187 = vmatpush1.msra.mxu0 %v159
    %188 = vmatprep.subr.mxu0 0.0
    %189 = vmatpush1.msra.mxu0 %v160
    %190 = vmatprep.subr.mxu0 0.0
    %191 = vmatpush1.msra.mxu0 %v161
    %192 = vmatprep.subr.mxu0 0.0
    %193 = vmatpush1.msra.mxu0 %v162
    %194 = vmatprep.subr.mxu0 0.0
    %195 = vmatpush1.msra.mxu0 %v163
    %196 = vmatprep.subr.mxu0 0.0
    %197 = vmatpush1.msra.mxu0 %v164
    %198 = vmatprep.subr.mxu0 0.0
    %199 = vmatpush1.msra.mxu0 %v165
    %200 = vmatprep.subr.mxu0 0.0
    %201 = vmatpush1.msra.mxu0 %v166
    %202 = vmatprep.subr.mxu0 0.0
    %203 = vmatpush1.msra.mxu0 %v167
    %204 = vmatprep.subr.mxu0 0.0
    %205 = vmatpush1.msra.mxu0 %v168
    %206 = vmatprep.subr.mxu0 0.0
    %207 = vmatpush1.msra.mxu0 0.0
    %208 = vmatprep.subr.mxu0 0.0
    %209 = vmatpush1.msra.mxu0 0.0
    %210 = vmatprep.subr.mxu0 0.0
    %211 = vmatpush1.msra.mxu0 0.0
    %212 = vmatprep.subr.mxu0 0.0
    %213 = vmatpush1.msra.mxu0 0.0
    %214 = vmatprep.subr.mxu0 0.0
    %215 = vmatpush1.msra.mxu0 0.0
    %216 = vmatprep.subr.mxu0 0.0
    %217 = vmatpush1.msra.mxu0 0.0
    %218 = vmatprep.subr.mxu0 0.0
    %219 = vmatpush1.msra.mxu0 0.0
    %220 = vmatprep.subr.mxu0 0.0
    %221 = vmatpush1.msra.mxu0 0.0
    %222 = vmatprep.subr.mxu0 0.0
    %223 = vmatpush1.msra.mxu0 0.0
    %224 = vmatprep.subr.mxu0 0.0
    %225 = vmatpush1.msra.mxu0 0.0
    %226 = vmatprep.subr.mxu0 0.0
    %227 = vmatpush1.msra.mxu0 0.0
    %228 = vmatprep.subr.mxu0 0.0
    %229 = vmatpush1.msra.mxu0 0.0
    %230 = vmatprep.subr.mxu0 0.0
    %231 = vmatpush1.msra.mxu0 0.0
    %232 = vmatprep.subr.mxu0 0.0
    %233 = vmatpush1.msra.mxu0 0.0
    %234 = vmatprep.subr.mxu0 0.0
    %235 = vmatpush1.msra.mxu0 0.0
    %236 = vmatprep.subr.mxu0 0.0
    %237 = vmatpush1.msra.mxu0 0.0
    %238 = vmatprep.mubr.f32.mxu0 0.0
    %239 = vmatmul.mubr.f32.gmra.mrb[0].mxu0 %v28
    %v240 = vpop.f32.mrb[0].mxu0
    %v241 = vadd.f32 %v173, %v240
    %v242 = vpop.f32.mrb[0].mxu0
    %243 = vmatprep.mubr.f32.mxu0 0.0
    %244 = vmatmul.mubr.f32.gmra.mrb[0].mxu0 %v29
    %v245 = vpop.f32.mrb[0].mxu0
    %v246 = vadd.f32 %v173, %v245
    %v247 = vpop.f32.mrb[0].mxu0
    %248 = vdwg.mxu0
    %v249 = vld [vmem:[%s4] sm:$0xff]
    %v250 = vld [vmem:[%s4 + $0x8] sm:$0xff]
    %v251 = vld [vmem:[%s4 + $0x10] sm:$0xff]
    %v252 = vld [vmem:[%s4 + $0x18] sm:$0xff]
    %v253 = vld [vmem:[%s4 + $0x20] sm:$0xff]
    %v254 = vld [vmem:[%s4 + $0x28] sm:$0xff]
    %v255 = vld [vmem:[%s4 + $0x30] sm:$0xff]
    %v256 = vld [vmem:[%s4 + $0x38] sm:$0xff]
    %v257 = vld [vmem:[%s4 + $0x40] sm:$0xff]
    %v258 = vld [vmem:[%s4 + $0x48] sm:$0xff]
    %v259 = vld [vmem:[%s4 + $0x50] sm:$0xff]
    %v260 = vld [vmem:[%s4 + $0x58] sm:$0xff]
    %v261 = vld [vmem:[%s4 + $0x60] sm:$0xff]
    %v262 = vld [vmem:[%s4 + $0x68] sm:$0xff]
    %v263 = vld [vmem:[%s4 + $0x70] sm:$0xff]
    %v264 = vld [vmem:[%s4 + $0x78] sm:$0xff]
    %v265 = vld [vmem:[%s5] sm:$0x1]
    %v266 = vlaneseq
    %v267 = vshrl.u32 %v266, 7
    %v268 = vsub.s32 0, %v267
    %v269 = vrot.slane %v265, %v268
    %270 = vmatprep.subr.mxu0 0.0
    %271 = vmatpush1.msra.mxu0 %v249
    %272 = vmatprep.subr.mxu0 0.0
    %273 = vmatpush1.msra.mxu0 %v250
    %274 = vmatprep.subr.mxu0 0.0
    %275 = vmatpush1.msra.mxu0 %v251
    %276 = vmatprep.subr.mxu0 0.0
    %277 = vmatpush1.msra.mxu0 %v252
    %278 = vmatprep.subr.mxu0 0.0
    %279 = vmatpush1.msra.mxu0 %v253
    %280 = vmatprep.subr.mxu0 0.0
    %281 = vmatpush1.msra.mxu0 %v254
    %282 = vmatprep.subr.mxu0 0.0
    %283 = vmatpush1.msra.mxu0 %v255
    %284 = vmatprep.subr.mxu0 0.0
    %285 = vmatpush1.msra.mxu0 %v256
    %286 = vmatprep.subr.mxu0 0.0
    %287 = vmatpush1.msra.mxu0 %v257
    %288 = vmatprep.subr.mxu0 0.0
    %289 = vmatpush1.msra.mxu0 %v258
    %290 = vmatprep.subr.mxu0 0.0
    %291 = vmatpush1.msra.mxu0 %v259
    %292 = vmatprep.subr.mxu0 0.0
    %293 = vmatpush1.msra.mxu0 %v260
    %294 = vmatprep.subr.mxu0 0.0
    %295 = vmatpush1.msra.mxu0 %v261
    %296 = vmatprep.subr.mxu0 0.0
    %297 = vmatpush1.msra.mxu0 %v262
    %298 = vmatprep.subr.mxu0 0.0
    %299 = vmatpush1.msra.mxu0 %v263
    %300 = vmatprep.subr.mxu0 0.0
    %301 = vmatpush1.msra.mxu0 %v264
    %302 = vmatprep.subr.mxu0 0.0
    %303 = vmatpush1.msra.mxu0 0.0
    %304 = vmatprep.subr.mxu0 0.0
    %305 = vmatpush1.msra.mxu0 0.0
    %306 = vmatprep.subr.mxu0 0.0
    %307 = vmatpush1.msra.mxu0 0.0
    %308 = vmatprep.subr.mxu0 0.0
    %309 = vmatpush1.msra.mxu0 0.0
    %310 = vmatprep.subr.mxu0 0.0
    %311 = vmatpush1.msra.mxu0 0.0
    %312 = vmatprep.subr.mxu0 0.0
    %313 = vmatpush1.msra.mxu0 0.0
    %314 = vmatprep.subr.mxu0 0.0
    %315 = vmatpush1.msra.mxu0 0.0
    %316 = vmatprep.subr.mxu0 0.0
    %317 = vmatpush1.msra.mxu0 0.0
    %318 = vmatprep.subr.mxu0 0.0
    %319 = vmatpush1.msra.mxu0 0.0
    %320 = vmatprep.subr.mxu0 0.0
    %321 = vmatpush1.msra.mxu0 0.0
    %322 = vmatprep.subr.mxu0 0.0
    %323 = vmatpush1.msra.mxu0 0.0
    %324 = vmatprep.subr.mxu0 0.0
    %325 = vmatpush1.msra.mxu0 0.0
    %326 = vmatprep.subr.mxu0 0.0
    %327 = vmatpush1.msra.mxu0 0.0
    %328 = vmatprep.subr.mxu0 0.0
    %329 = vmatpush1.msra.mxu0 0.0
    %330 = vmatprep.subr.mxu0 0.0
    %331 = vmatpush1.msra.mxu0 0.0
    %332 = vmatprep.subr.mxu0 0.0
    %333 = vmatpush1.msra.mxu0 0.0
    %334 = vmatprep.mubr.f32.mxu0 0.0
    %335 = vmatmul.mubr.f32.gmra.mrb[0].mxu0 %v27
    %v336 = vpop.f32.mrb[0].mxu0
    %v337 = vadd.f32 %v269, %v336
    %v338 = vpop.f32.mrb[0].mxu0
    %339 = vdwg.mxu0
    %v340 = vxor.u32 %v337, 2147483648
    %v341 = vmul.f32 %v340, 1.442695
    %v342 = vpow.pop %v341
    %v343 = vadd.f32 %v342, 1.0
    %v344 = vrcp.pop %v343
    %v345 = vmul.f32 1.0, %v344
    %v346 = vmul.f32 %v337, %v345
    %vm347 = vcmask 64512
    %v349 = vsel %vm347, %v44, 0
    %v352 = vsel %vm347, %v45, 0
    %354 = vmatprep.subr.mxu0 0.0
    %355 = vmatpush1.msra.mxu0 %v346
    %356 = vmatprep.subr.mxu0 0.0
    %357 = vmatpush1.msra.mxu0 0.0
    %358 = vmatprep.subr.mxu0 0.0
    %359 = vmatpush1.msra.mxu0 0.0
    %360 = vmatprep.subr.mxu0 0.0
    %361 = vmatpush1.msra.mxu0 0.0
    %362 = vmatprep.subr.mxu0 0.0
    %363 = vmatpush1.msra.mxu0 0.0
    %364 = vmatprep.subr.mxu0 0.0
    %365 = vmatpush1.msra.mxu0 0.0
    %366 = vmatprep.subr.mxu0 0.0
    %367 = vmatpush1.msra.mxu0 0.0
    %368 = vmatprep.subr.mxu0 0.0
    %369 = vmatpush1.msra.mxu0 0.0
    %370 = vmatprep.subr.mxu0 0.0
    %371 = vmatpush1.msra.mxu0 0.0
    %372 = vmatprep.subr.mxu0 0.0
    %373 = vmatpush1.msra.mxu0 0.0
    %374 = vmatprep.subr.mxu0 0.0
    %375 = vmatpush1.msra.mxu0 0.0
    %376 = vmatprep.subr.mxu0 0.0
    %377 = vmatpush1.msra.mxu0 0.0
    %378 = vmatprep.subr.mxu0 0.0
    %379 = vmatpush1.msra.mxu0 0.0
    %380 = vmatprep.subr.mxu0 0.0
    %381 = vmatpush1.msra.mxu0 0.0
    %382 = vmatprep.subr.mxu0 0.0
    %383 = vmatpush1.msra.mxu0 0.0
    %384 = vmatprep.subr.mxu0 0.0
    %385 = vmatpush1.msra.mxu0 0.0
    %386 = vmatprep.subr.mxu0 0.0
    %387 = vmatpush1.msra.mxu0 0.0
    %388 = vmatprep.subr.mxu0 0.0
    %389 = vmatpush1.msra.mxu0 0.0
    %390 = vmatprep.subr.mxu0 0.0
    %391 = vmatpush1.msra.mxu0 0.0
    %392 = vmatprep.subr.mxu0 0.0
    %393 = vmatpush1.msra.mxu0 0.0
    %394 = vmatprep.subr.mxu0 0.0
    %395 = vmatpush1.msra.mxu0 0.0
    %396 = vmatprep.subr.mxu0 0.0
    %397 = vmatpush1.msra.mxu0 0.0
    %398 = vmatprep.subr.mxu0 0.0
    %399 = vmatpush1.msra.mxu0 0.0
    %400 = vmatprep.subr.mxu0 0.0
    %401 = vmatpush1.msra.mxu0 0.0
    %402 = vmatprep.subr.mxu0 0.0
    %403 = vmatpush1.msra.mxu0 0.0
    %404 = vmatprep.subr.mxu0 0.0
    %405 = vmatpush1.msra.mxu0 0.0
    %406 = vmatprep.subr.mxu0 0.0
    %407 = vmatpush1.msra.mxu0 0.0
    %408 = vmatprep.subr.mxu0 0.0
    %409 = vmatpush1.msra.mxu0 0.0
    %410 = vmatprep.subr.mxu0 0.0
    %411 = vmatpush1.msra.mxu0 0.0
    %412 = vmatprep.subr.mxu0 0.0
    %413 = vmatpush1.msra.mxu0 0.0
    %414 = vmatprep.subr.mxu0 0.0
    %415 = vmatpush1.msra.mxu0 0.0
    %416 = vmatprep.subr.mxu0 0.0
    %417 = vmatpush1.msra.mxu0 0.0
    %418 = vmatprep.mubr.f32.mxu0 0.0
    %419 = vmatmul.mubr.f32.gmra.mrb[0].mxu0 %v349
    %v420 = vpop.f32.mrb[0].mxu0
    %v421 = vadd.f32 0.0, %v420
    %v422 = vpop.f32.mrb[0].mxu0
    %423 = vmatprep.mubr.f32.mxu0 0.0
    %424 = vmatmul.mubr.f32.gmra.mrb[0].mxu0 %v352
    %v425 = vpop.f32.mrb[0].mxu0
    %v426 = vadd.f32 0.0, %v425
    %v427 = vpop.f32.mrb[0].mxu0
    %428 = vdwg.mxu0
    %v430 = vsel %vm347, %v58, 0
    %v433 = vsel %vm347, %v59, 0
    %435 = vmatprep.subr.mxu0 0.0
    %436 = vmatpush1.msra.mxu0 %v346
    %437 = vmatprep.subr.mxu0 0.0
    %438 = vmatpush1.msra.mxu0 0.0
    %439 = vmatprep.subr.mxu0 0.0
    %440 = vmatpush1.msra.mxu0 0.0
    %441 = vmatprep.subr.mxu0 0.0
    %442 = vmatpush1.msra.mxu0 0.0
    %443 = vmatprep.subr.mxu0 0.0
    %444 = vmatpush1.msra.mxu0 0.0
    %445 = vmatprep.subr.mxu0 0.0
    %446 = vmatpush1.msra.mxu0 0.0
    %447 = vmatprep.subr.mxu0 0.0
    %448 = vmatpush1.msra.mxu0 0.0
    %449 = vmatprep.subr.mxu0 0.0
    %450 = vmatpush1.msra.mxu0 0.0
    %451 = vmatprep.subr.mxu0 0.0
    %452 = vmatpush1.msra.mxu0 0.0
    %453 = vmatprep.subr.mxu0 0.0
    %454 = vmatpush1.msra.mxu0 0.0
    %455 = vmatprep.subr.mxu0 0.0
    %456 = vmatpush1.msra.mxu0 0.0
    %457 = vmatprep.subr.mxu0 0.0
    %458 = vmatpush1.msra.mxu0 0.0
    %459 = vmatprep.subr.mxu0 0.0
    %460 = vmatpush1.msra.mxu0 0.0
    %461 = vmatprep.subr.mxu0 0.0
    %462 = vmatpush1.msra.mxu0 0.0
    %463 = vmatprep.subr.mxu0 0.0
    %464 = vmatpush1.msra.mxu0 0.0
    %465 = vmatprep.subr.mxu0 0.0
    %466 = vmatpush1.msra.mxu0 0.0
    %467 = vmatprep.subr.mxu0 0.0
    %468 = vmatpush1.msra.mxu0 0.0
    %469 = vmatprep.subr.mxu0 0.0
    %470 = vmatpush1.msra.mxu0 0.0
    %471 = vmatprep.subr.mxu0 0.0
    %472 = vmatpush1.msra.mxu0 0.0
    %473 = vmatprep.subr.mxu0 0.0
    %474 = vmatpush1.msra.mxu0 0.0
    %475 = vmatprep.subr.mxu0 0.0
    %476 = vmatpush1.msra.mxu0 0.0
    %477 = vmatprep.subr.mxu0 0.0
    %478 = vmatpush1.msra.mxu0 0.0
    %479 = vmatprep.subr.mxu0 0.0
    %480 = vmatpush1.msra.mxu0 0.0
    %481 = vmatprep.subr.mxu0 0.0
    %482 = vmatpush1.msra.mxu0 0.0
    %483 = vmatprep.subr.mxu0 0.0
    %484 = vmatpush1.msra.mxu0 0.0
    %485 = vmatprep.subr.mxu0 0.0
    %486 = vmatpush1.msra.mxu0 0.0
    %487 = vmatprep.subr.mxu0 0.0
    %488 = vmatpush1.msra.mxu0 0.0
    %489 = vmatprep.subr.mxu0 0.0
    %490 = vmatpush1.msra.mxu0 0.0
    %491 = vmatprep.subr.mxu0 0.0
    %492 = vmatpush1.msra.mxu0 0.0
    %493 = vmatprep.subr.mxu0 0.0
    %494 = vmatpush1.msra.mxu0 0.0
    %495 = vmatprep.subr.mxu0 0.0
    %496 = vmatpush1.msra.mxu0 0.0
    %497 = vmatprep.subr.mxu0 0.0
    %498 = vmatpush1.msra.mxu0 0.0
    %499 = vmatprep.mubr.f32.mxu0 0.0
    %500 = vmatmul.mubr.f32.gmra.mrb[0].mxu0 %v430
    %v501 = vpop.f32.mrb[0].mxu0
    %v502 = vadd.f32 0.0, %v501
    %v503 = vpop.f32.mrb[0].mxu0
    %504 = vmatprep.mubr.f32.mxu0 0.0
    %505 = vmatmul.mubr.f32.gmra.mrb[0].mxu0 %v433
    %v506 = vpop.f32.mrb[0].mxu0
    %v507 = vadd.f32 0.0, %v506
    %v508 = vpop.f32.mrb[0].mxu0
    %509 = vdwg.mxu0
    %v510 = vld [vmem:[%s6] sm:$0xff]
    %v511 = vld [vmem:[%s6 + $0x8] sm:$0xff]
    %v512 = vld [vmem:[%s6 + $0x10] sm:$0xff]
    %v513 = vld [vmem:[%s6 + $0x18] sm:$0xff]
    %v514 = vld [vmem:[%s6 + $0x20] sm:$0xff]
    %v515 = vld [vmem:[%s6 + $0x28] sm:$0xff]
    %v516 = vld [vmem:[%s6 + $0x30] sm:$0xff]
    %v517 = vld [vmem:[%s6 + $0x38] sm:$0xff]
    %v518 = vld [vmem:[%s6 + $0x40] sm:$0xff]
    %v519 = vld [vmem:[%s6 + $0x48] sm:$0xff]
    %v520 = vld [vmem:[%s6 + $0x50] sm:$0xff]
    %v521 = vld [vmem:[%s6 + $0x58] sm:$0xff]
    %v522 = vld [vmem:[%s6 + $0x60] sm:$0xff]
    %v523 = vld [vmem:[%s6 + $0x68] sm:$0xff]
    %v524 = vld [vmem:[%s6 + $0x70] sm:$0xff]
    %v525 = vld [vmem:[%s6 + $0x78] sm:$0xff]
    %v526 = vld [vmem:[%s6 + $0x80] sm:$0xff]
    %v527 = vld [vmem:[%s6 + $0x88] sm:$0xff]
    %v528 = vld [vmem:[%s6 + $0x90] sm:$0xff]
    %v529 = vld [vmem:[%s6 + $0x98] sm:$0xff]
    %v530 = vld [vmem:[%s6 + $0xa0] sm:$0xff]
    %v531 = vld [vmem:[%s6 + $0xa8] sm:$0xff]
    %v532 = vld [vmem:[%s6 + $0xb0] sm:$0xff]
    %v533 = vld [vmem:[%s6 + $0xb8] sm:$0xff]
    %v534 = vld [vmem:[%s6 + $0xc0] sm:$0xff]
    %v535 = vld [vmem:[%s6 + $0xc8] sm:$0xff]
    %v536 = vld [vmem:[%s6 + $0xd0] sm:$0xff]
    %v537 = vld [vmem:[%s6 + $0xd8] sm:$0xff]
    %v538 = vld [vmem:[%s6 + $0xe0] sm:$0xff]
    %v539 = vld [vmem:[%s6 + $0xe8] sm:$0xff]
    %v540 = vld [vmem:[%s6 + $0xf0] sm:$0xff]
    %v541 = vld [vmem:[%s6 + $0xf8] sm:$0xff]
    %542 = vmatprep.subr.mxu0 0.0
    %543 = vmatpush1.msra.mxu0 %v510
    %544 = vmatprep.subr.mxu0 0.0
    %545 = vmatpush1.msra.mxu0 %v511
    %546 = vmatprep.subr.mxu0 0.0
    %547 = vmatpush1.msra.mxu0 %v512
    %548 = vmatprep.subr.mxu0 0.0
    %549 = vmatpush1.msra.mxu0 %v513
    %550 = vmatprep.subr.mxu0 0.0
    %551 = vmatpush1.msra.mxu0 %v514
    %552 = vmatprep.subr.mxu0 0.0
    %553 = vmatpush1.msra.mxu0 %v515
    %554 = vmatprep.subr.mxu0 0.0
    %555 = vmatpush1.msra.mxu0 %v516
    %556 = vmatprep.subr.mxu0 0.0
    %557 = vmatpush1.msra.mxu0 %v517
    %558 = vmatprep.subr.mxu0 0.0
    %559 = vmatpush1.msra.mxu0 %v518
    %560 = vmatprep.subr.mxu0 0.0
    %561 = vmatpush1.msra.mxu0 %v519
    %562 = vmatprep.subr.mxu0 0.0
    %563 = vmatpush1.msra.mxu0 %v520
    %564 = vmatprep.subr.mxu0 0.0
    %565 = vmatpush1.msra.mxu0 %v521
    %566 = vmatprep.subr.mxu0 0.0
    %567 = vmatpush1.msra.mxu0 %v522
    %568 = vmatprep.subr.mxu0 0.0
    %569 = vmatpush1.msra.mxu0 %v523
    %570 = vmatprep.subr.mxu0 0.0
    %571 = vmatpush1.msra.mxu0 %v524
    %572 = vmatprep.subr.mxu0 0.0
    %573 = vmatpush1.msra.mxu0 %v525
    %574 = vmatprep.subr.mxu0 0.0
    %575 = vmatpush1.msra.mxu0 %v526
    %576 = vmatprep.subr.mxu0 0.0
    %577 = vmatpush1.msra.mxu0 %v527
    %578 = vmatprep.subr.mxu0 0.0
    %579 = vmatpush1.msra.mxu0 %v528
    %580 = vmatprep.subr.mxu0 0.0
    %581 = vmatpush1.msra.mxu0 %v529
    %582 = vmatprep.subr.mxu0 0.0
    %583 = vmatpush1.msra.mxu0 %v530
    %584 = vmatprep.subr.mxu0 0.0
    %585 = vmatpush1.msra.mxu0 %v531
    %586 = vmatprep.subr.mxu0 0.0
    %587 = vmatpush1.msra.mxu0 %v532
    %588 = vmatprep.subr.mxu0 0.0
    %589 = vmatpush1.msra.mxu0 %v533
    %590 = vmatprep.subr.mxu0 0.0
    %591 = vmatpush1.msra.mxu0 %v534
    %592 = vmatprep.subr.mxu0 0.0
    %593 = vmatpush1.msra.mxu0 %v535
    %594 = vmatprep.subr.mxu0 0.0
    %595 = vmatpush1.msra.mxu0 %v536
    %596 = vmatprep.subr.mxu0 0.0
    %597 = vmatpush1.msra.mxu0 %v537
    %598 = vmatprep.subr.mxu0 0.0
    %599 = vmatpush1.msra.mxu0 %v538
    %600 = vmatprep.subr.mxu0 0.0
    %601 = vmatpush1.msra.mxu0 %v539
    %602 = vmatprep.subr.mxu0 0.0
    %603 = vmatpush1.msra.mxu0 %v540
    %604 = vmatprep.subr.mxu0 0.0
    %605 = vmatpush1.msra.mxu0 %v541
    %606 = vmatprep.mubr.f32.mxu0 %v502
    %607 = vmatmul.mubr.f32.gmra.mrb[0].mxu0 %v421
    %v608 = vpop.f32.mrb[0].mxu0
    %v609 = vadd.f32 %v241, %v608
    %v610 = vpop.f32.mrb[0].mxu0
    %611 = vmatprep.mubr.f32.mxu0 %v507
    %612 = vmatmul.mubr.f32.gmra.mrb[0].mxu0 %v426
    %v613 = vpop.f32.mrb[0].mxu0
    %v614 = vadd.f32 %v246, %v613
    %v615 = vpop.f32.mrb[0].mxu0
    %616 = vdwg.mxu0
    %v617 = vxor.u32 %v609, 2147483648
    %v618 = vxor.u32 %v614, 2147483648
    %v619 = vmul.f32 %v617, 1.442695
    %v620 = vpow.pop %v619
    %v621 = vmul.f32 %v618, 1.442695
    %v622 = vpow.pop %v621
    %v623 = vadd.f32 %v620, 1.0
    %v624 = vadd.f32 %v622, 1.0
    %v625 = vrcp.pop %v623
    %v626 = vmul.f32 1.0, %v625
    %v627 = vrcp.pop %v624
    %v628 = vmul.f32 1.0, %v627
    %v629 = vmul.f32 %v609, %v626
    %v630 = vmul.f32 %v614, %v628
    %v631 = vmul.f32 %v144, %v629
    %v632 = vmul.f32 %v149, %v630
    %633 = vxpose.xlu0.b32.start [1/16] %v44, 128
    %634 = vxpose.xlu0.b32.cont [2/16] %v45, 128
    %635 = vxpose.xlu0.b32.cont [3/16] 0.0, 128
    %636 = vxpose.xlu0.b32.cont [4/16] 0.0, 128
    %637 = vxpose.xlu0.b32.cont [5/16] 0.0, 128
    %638 = vxpose.xlu0.b32.cont [6/16] 0.0, 128
    %639 = vxpose.xlu0.b32.cont [7/16] 0.0, 128
    %640 = vxpose.xlu0.b32.cont [8/16] 0.0, 128
    %641 = vxpose.xlu0.b32.cont [9/16] 0.0, 128
    %642 = vxpose.xlu0.b32.cont [10/16] 0.0, 128
    %643 = vxpose.xlu0.b32.cont [11/16] 0.0, 128
    %644 = vxpose.xlu0.b32.cont [12/16] 0.0, 128
    %645 = vxpose.xlu0.b32.cont [13/16] 0.0, 128
    %646 = vxpose.xlu0.b32.cont [14/16] 0.0, 128
    %647 = vxpose.xlu0.b32.cont [15/16] 0.0, 128
    %648 = vxpose.xlu0.b32.end [16/16] 0.0, 128
    %v649 = vpop.trf.xlu0
    %v650 = vpop.trf.xlu0
    %v651 = vpop.trf.xlu0
    %v652 = vpop.trf.xlu0
    %v653 = vpop.trf.xlu0
    %v654 = vpop.trf.xlu0
    %v655 = vpop.trf.xlu0
    %v656 = vpop.trf.xlu0
    %v657 = vpop.trf.xlu0
    %v658 = vpop.trf.xlu0
    %v659 = vpop.trf.xlu0
    %v660 = vpop.trf.xlu0
    %v661 = vpop.trf.xlu0
    %v662 = vpop.trf.xlu0
    %v663 = vpop.trf.xlu0
    %v664 = vpop.trf.xlu0
    %vm665 = vcmask 130048
    %v667 = vsel %vm665, %v649, 0
    %669 = vmatprep.subr.mxu0 0.0
    %670 = vmatpush1.msra.mxu0 %v631
    %671 = vmatprep.subr.mxu0 0.0
    %672 = vmatpush1.msra.mxu0 %v632
    %673 = vmatprep.subr.mxu0 0.0
    %674 = vmatpush1.msra.mxu0 0.0
    %675 = vmatprep.subr.mxu0 0.0
    %676 = vmatpush1.msra.mxu0 0.0
    %677 = vmatprep.subr.mxu0 0.0
    %678 = vmatpush1.msra.mxu0 0.0
    %679 = vmatprep.subr.mxu0 0.0
    %680 = vmatpush1.msra.mxu0 0.0
    %681 = vmatprep.subr.mxu0 0.0
    %682 = vmatpush1.msra.mxu0 0.0
    %683 = vmatprep.subr.mxu0 0.0
    %684 = vmatpush1.msra.mxu0 0.0
    %685 = vmatprep.subr.mxu0 0.0
    %686 = vmatpush1.msra.mxu0 0.0
    %687 = vmatprep.subr.mxu0 0.0
    %688 = vmatpush1.msra.mxu0 0.0
    %689 = vmatprep.subr.mxu0 0.0
    %690 = vmatpush1.msra.mxu0 0.0
    %691 = vmatprep.subr.mxu0 0.0
    %692 = vmatpush1.msra.mxu0 0.0
    %693 = vmatprep.subr.mxu0 0.0
    %694 = vmatpush1.msra.mxu0 0.0
    %695 = vmatprep.subr.mxu0 0.0
    %696 = vmatpush1.msra.mxu0 0.0
    %697 = vmatprep.subr.mxu0 0.0
    %698 = vmatpush1.msra.mxu0 0.0
    %699 = vmatprep.subr.mxu0 0.0
    %700 = vmatpush1.msra.mxu0 0.0
    %701 = vmatprep.subr.mxu0 0.0
    %702 = vmatpush1.msra.mxu0 0.0
    %703 = vmatprep.subr.mxu0 0.0
    %704 = vmatpush1.msra.mxu0 0.0
    %705 = vmatprep.subr.mxu0 0.0
    %706 = vmatpush1.msra.mxu0 0.0
    %707 = vmatprep.subr.mxu0 0.0
    %708 = vmatpush1.msra.mxu0 0.0
    %709 = vmatprep.subr.mxu0 0.0
    %710 = vmatpush1.msra.mxu0 0.0
    %711 = vmatprep.subr.mxu0 0.0
    %712 = vmatpush1.msra.mxu0 0.0
    %713 = vmatprep.subr.mxu0 0.0
    %714 = vmatpush1.msra.mxu0 0.0
    %715 = vmatprep.subr.mxu0 0.0
    %716 = vmatpush1.msra.mxu0 0.0
    %717 = vmatprep.subr.mxu0 0.0
    %718 = vmatpush1.msra.mxu0 0.0
    %719 = vmatprep.subr.mxu0 0.0
    %720 = vmatpush1.msra.mxu0 0.0
    %721 = vmatprep.subr.mxu0 0.0
    %722 = vmatpush1.msra.mxu0 0.0
    %723 = vmatprep.subr.mxu0 0.0
    %724 = vmatpush1.msra.mxu0 0.0
    %725 = vmatprep.subr.mxu0 0.0
    %726 = vmatpush1.msra.mxu0 0.0
    %727 = vmatprep.subr.mxu0 0.0
    %728 = vmatpush1.msra.mxu0 0.0
    %729 = vmatprep.subr.mxu0 0.0
    %730 = vmatpush1.msra.mxu0 0.0
    %731 = vmatprep.subr.mxu0 0.0
    %732 = vmatpush1.msra.mxu0 0.0
    %733 = vmatprep.mubr.f32.mxu0 0.0
    %734 = vmatmul.mubr.f32.gmra.mrb[0].mxu0 %v667
    %v735 = vpop.f32.mrb[0].mxu0
    %v736 = vadd.f32 %v346, %v735
    %v737 = vpop.f32.mrb[0].mxu0
    %738 = vdwg.mxu0
    %s739 = scalar_lea.vmem %s4, 384
    %v740 = vld [vmem:[%s739] sm:$0xff]
    %v741 = vld [vmem:[%s739 + $0x8] sm:$0xff]
    %v742 = vld [vmem:[%s739 + $0x10] sm:$0xff]
    %v743 = vld [vmem:[%s739 + $0x18] sm:$0xff]
    %v744 = vld [vmem:[%s739 + $0x20] sm:$0xff]
    %v745 = vld [vmem:[%s739 + $0x28] sm:$0xff]
    %v746 = vld [vmem:[%s739 + $0x30] sm:$0xff]
    %v747 = vld [vmem:[%s739 + $0x38] sm:$0xff]
    %v748 = vld [vmem:[%s739 + $0x40] sm:$0xff]
    %v749 = vld [vmem:[%s739 + $0x48] sm:$0xff]
    %v750 = vld [vmem:[%s739 + $0x50] sm:$0xff]
    %v751 = vld [vmem:[%s739 + $0x58] sm:$0xff]
    %v752 = vld [vmem:[%s739 + $0x60] sm:$0xff]
    %v753 = vld [vmem:[%s739 + $0x68] sm:$0xff]
    %v754 = vld [vmem:[%s739 + $0x70] sm:$0xff]
    %v755 = vld [vmem:[%s739 + $0x78] sm:$0xff]
    %v756 = vld [vmem:[%s5 + $0x3] sm:$0x1]
    %v757 = vlaneseq
    %v758 = vshrl.u32 %v757, 7
    %v759 = vsub.s32 0, %v758
    %v760 = vrot.slane %v756, %v759
    %761 = vmatprep.subr.mxu0 0.0
    %762 = vmatpush1.msra.mxu0 %v740
    %763 = vmatprep.subr.mxu0 0.0
    %764 = vmatpush1.msra.mxu0 %v741
    %765 = vmatprep.subr.mxu0 0.0
    %766 = vmatpush1.msra.mxu0 %v742
    %767 = vmatprep.subr.mxu0 0.0
    %768 = vmatpush1.msra.mxu0 %v743
    %769 = vmatprep.subr.mxu0 0.0
    %770 = vmatpush1.msra.mxu0 %v744
    %771 = vmatprep.subr.mxu0 0.0
    %772 = vmatpush1.msra.mxu0 %v745
    %773 = vmatprep.subr.mxu0 0.0
    %774 = vmatpush1.msra.mxu0 %v746
    %775 = vmatprep.subr.mxu0 0.0
    %776 = vmatpush1.msra.mxu0 %v747
    %777 = vmatprep.subr.mxu0 0.0
    %778 = vmatpush1.msra.mxu0 %v748
    %779 = vmatprep.subr.mxu0 0.0
    %780 = vmatpush1.msra.mxu0 %v749
    %781 = vmatprep.subr.mxu0 0.0
    %782 = vmatpush1.msra.mxu0 %v750
    %783 = vmatprep.subr.mxu0 0.0
    %784 = vmatpush1.msra.mxu0 %v751
    %785 = vmatprep.subr.mxu0 0.0
    %786 = vmatpush1.msra.mxu0 %v752
    %787 = vmatprep.subr.mxu0 0.0
    %788 = vmatpush1.msra.mxu0 %v753
    %789 = vmatprep.subr.mxu0 0.0
    %790 = vmatpush1.msra.mxu0 %v754
    %791 = vmatprep.subr.mxu0 0.0
    %792 = vmatpush1.msra.mxu0 %v755
    %793 = vmatprep.subr.mxu0 0.0
    %794 = vmatpush1.msra.mxu0 0.0
    %795 = vmatprep.subr.mxu0 0.0
    %796 = vmatpush1.msra.mxu0 0.0
    %797 = vmatprep.subr.mxu0 0.0
    %798 = vmatpush1.msra.mxu0 0.0
    %799 = vmatprep.subr.mxu0 0.0
    %800 = vmatpush1.msra.mxu0 0.0
    %801 = vmatprep.subr.mxu0 0.0
    %802 = vmatpush1.msra.mxu0 0.0
    %803 = vmatprep.subr.mxu0 0.0
    %804 = vmatpush1.msra.mxu0 0.0
    %805 = vmatprep.subr.mxu0 0.0
    %806 = vmatpush1.msra.mxu0 0.0
    %807 = vmatprep.subr.mxu0 0.0
    %808 = vmatpush1.msra.mxu0 0.0
    %809 = vmatprep.subr.mxu0 0.0
    %810 = vmatpush1.msra.mxu0 0.0
    %811 = vmatprep.subr.mxu0 0.0
    %812 = vmatpush1.msra.mxu0 0.0
    %813 = vmatprep.subr.mxu0 0.0
    %814 = vmatpush1.msra.mxu0 0.0
    %815 = vmatprep.subr.mxu0 0.0
    %816 = vmatpush1.msra.mxu0 0.0
    %817 = vmatprep.subr.mxu0 0.0
    %818 = vmatpush1.msra.mxu0 0.0
    %819 = vmatprep.subr.mxu0 0.0
    %820 = vmatpush1.msra.mxu0 0.0
    %821 = vmatprep.subr.mxu0 0.0
    %822 = vmatpush1.msra.mxu0 0.0
    %823 = vmatprep.subr.mxu0 0.0
    %824 = vmatpush1.msra.mxu0 0.0
    %825 = vmatprep.mubr.f32.mxu0 0.0
    %826 = vmatmul.mubr.f32.gmra.mrb[0].mxu0 %v736
    %v827 = vpop.f32.mrb[0].mxu0
    %v828 = vadd.f32 %v760, %v827
    %v829 = vpop.f32.mrb[0].mxu0
    %830 = vdwg.mxu0
    %v831 = vxor.u32 %v828, 2147483648
    %v832 = vmul.f32 %v831, 1.442695
    %v833 = vpow.pop %v832
    %v834 = vadd.f32 %v833, 1.0
    %v835 = vrcp.pop %v834
    %v836 = vmul.f32 1.0, %v835
    %v837 = vmul.f32 %v828, %v836
    %s838 = scalar_lea.vmem %s4, 512
    %v839 = vld [vmem:[%s838] sm:$0xff]
    %v840 = vld [vmem:[%s838 + $0x8] sm:$0xff]
    %v841 = vld [vmem:[%s838 + $0x10] sm:$0xff]
    %v842 = vld [vmem:[%s838 + $0x18] sm:$0xff]
    %v843 = vld [vmem:[%s838 + $0x20] sm:$0xff]
    %v844 = vld [vmem:[%s838 + $0x28] sm:$0xff]
    %v845 = vld [vmem:[%s838 + $0x30] sm:$0xff]
    %v846 = vld [vmem:[%s838 + $0x38] sm:$0xff]
    %v847 = vld [vmem:[%s838 + $0x40] sm:$0xff]
    %v848 = vld [vmem:[%s838 + $0x48] sm:$0xff]
    %v849 = vld [vmem:[%s838 + $0x50] sm:$0xff]
    %v850 = vld [vmem:[%s838 + $0x58] sm:$0xff]
    %v851 = vld [vmem:[%s838 + $0x60] sm:$0xff]
    %v852 = vld [vmem:[%s838 + $0x68] sm:$0xff]
    %v853 = vld [vmem:[%s838 + $0x70] sm:$0xff]
    %v854 = vld [vmem:[%s838 + $0x78] sm:$0xff]
    %v855 = vld [vmem:[%s5 + $0x4] sm:$0x1]
    %v856 = vlaneseq
    %v857 = vshrl.u32 %v856, 7
    %v858 = vsub.s32 0, %v857
    %v859 = vrot.slane %v855, %v858
    %860 = vmatprep.subr.mxu0 0.0
    %861 = vmatpush1.msra.mxu0 %v839
    %862 = vmatprep.subr.mxu0 0.0
    %863 = vmatpush1.msra.mxu0 %v840
    %864 = vmatprep.subr.mxu0 0.0
    %865 = vmatpush1.msra.mxu0 %v841
    %866 = vmatprep.subr.mxu0 0.0
    %867 = vmatpush1.msra.mxu0 %v842
    %868 = vmatprep.subr.mxu0 0.0
    %869 = vmatpush1.msra.mxu0 %v843
    %870 = vmatprep.subr.mxu0 0.0
    %871 = vmatpush1.msra.mxu0 %v844
    %872 = vmatprep.subr.mxu0 0.0
    %873 = vmatpush1.msra.mxu0 %v845
    %874 = vmatprep.subr.mxu0 0.0
    %875 = vmatpush1.msra.mxu0 %v846
    %876 = vmatprep.subr.mxu0 0.0
    %877 = vmatpush1.msra.mxu0 %v847
    %878 = vmatprep.subr.mxu0 0.0
    %879 = vmatpush1.msra.mxu0 %v848
    %880 = vmatprep.subr.mxu0 0.0
    %881 = vmatpush1.msra.mxu0 %v849
    %882 = vmatprep.subr.mxu0 0.0
    %883 = vmatpush1.msra.mxu0 %v850
    %884 = vmatprep.subr.mxu0 0.0
    %885 = vmatpush1.msra.mxu0 %v851
    %886 = vmatprep.subr.mxu0 0.0
    %887 = vmatpush1.msra.mxu0 %v852
    %888 = vmatprep.subr.mxu0 0.0
    %889 = vmatpush1.msra.mxu0 %v853
    %890 = vmatprep.subr.mxu0 0.0
    %891 = vmatpush1.msra.mxu0 %v854
    %892 = vmatprep.subr.mxu0 0.0
    %893 = vmatpush1.msra.mxu0 0.0
    %894 = vmatprep.subr.mxu0 0.0
    %895 = vmatpush1.msra.mxu0 0.0
    %896 = vmatprep.subr.mxu0 0.0
    %897 = vmatpush1.msra.mxu0 0.0
    %898 = vmatprep.subr.mxu0 0.0
    %899 = vmatpush1.msra.mxu0 0.0
    %900 = vmatprep.subr.mxu0 0.0
    %901 = vmatpush1.msra.mxu0 0.0
    %902 = vmatprep.subr.mxu0 0.0
    %903 = vmatpush1.msra.mxu0 0.0
    %904 = vmatprep.subr.mxu0 0.0
    %905 = vmatpush1.msra.mxu0 0.0
    %906 = vmatprep.subr.mxu0 0.0
    %907 = vmatpush1.msra.mxu0 0.0
    %908 = vmatprep.subr.mxu0 0.0
    %909 = vmatpush1.msra.mxu0 0.0
    %910 = vmatprep.subr.mxu0 0.0
    %911 = vmatpush1.msra.mxu0 0.0
    %912 = vmatprep.subr.mxu0 0.0
    %913 = vmatpush1.msra.mxu0 0.0
    %914 = vmatprep.subr.mxu0 0.0
    %915 = vmatpush1.msra.mxu0 0.0
    %916 = vmatprep.subr.mxu0 0.0
    %917 = vmatpush1.msra.mxu0 0.0
    %918 = vmatprep.subr.mxu0 0.0
    %919 = vmatpush1.msra.mxu0 0.0
    %920 = vmatprep.subr.mxu0 0.0
    %921 = vmatpush1.msra.mxu0 0.0
    %922 = vmatprep.subr.mxu0 0.0
    %923 = vmatpush1.msra.mxu0 0.0
    %924 = vmatprep.mubr.f32.mxu0 0.0
    %925 = vmatmul.mubr.f32.gmra.mrb[0].mxu0 %v837
    %v926 = vpop.f32.mrb[0].mxu0
    %v927 = vadd.f32 %v859, %v926
    %v928 = vpop.f32.mrb[0].mxu0
    %929 = vdwg.mxu0
    %v930 = vxor.u32 %v927, 2147483648
    %v931 = vmul.f32 %v930, 1.442695
    %v932 = vpow.pop %v931
    %v933 = vadd.f32 %v932, 1.0
    %v934 = vrcp.pop %v933
    %v935 = vmul.f32 1.0, %v934
    %v936 = vmul.f32 %v927, %v935
    %v937 = vadd.f32 %v936, %v736
    %s938 = scalar_lea.vmem %s4, 256
    %v939 = vld [vmem:[%s938] sm:$0xff]
    %v940 = vld [vmem:[%s938 + $0x8] sm:$0xff]
    %v941 = vld [vmem:[%s938 + $0x10] sm:$0xff]
    %v942 = vld [vmem:[%s938 + $0x18] sm:$0xff]
    %v943 = vld [vmem:[%s938 + $0x20] sm:$0xff]
    %v944 = vld [vmem:[%s938 + $0x28] sm:$0xff]
    %v945 = vld [vmem:[%s938 + $0x30] sm:$0xff]
    %v946 = vld [vmem:[%s938 + $0x38] sm:$0xff]
    %v947 = vld [vmem:[%s938 + $0x40] sm:$0xff]
    %v948 = vld [vmem:[%s938 + $0x48] sm:$0xff]
    %v949 = vld [vmem:[%s938 + $0x50] sm:$0xff]
    %v950 = vld [vmem:[%s938 + $0x58] sm:$0xff]
    %v951 = vld [vmem:[%s938 + $0x60] sm:$0xff]
    %v952 = vld [vmem:[%s938 + $0x68] sm:$0xff]
    %v953 = vld [vmem:[%s938 + $0x70] sm:$0xff]
    %v954 = vld [vmem:[%s938 + $0x78] sm:$0xff]
    %v955 = vld [vmem:[%s5 + $0x2] sm:$0x1]
    %v956 = vlaneseq
    %v957 = vshrl.u32 %v956, 7
    %v958 = vsub.s32 0, %v957
    %v959 = vrot.slane %v955, %v958
    %960 = vmatprep.subr.mxu0 0.0
    %961 = vmatpush1.msra.mxu0 %v939
    %962 = vmatprep.subr.mxu0 0.0
    %963 = vmatpush1.msra.mxu0 %v940
    %964 = vmatprep.subr.mxu0 0.0
    %965 = vmatpush1.msra.mxu0 %v941
    %966 = vmatprep.subr.mxu0 0.0
    %967 = vmatpush1.msra.mxu0 %v942
    %968 = vmatprep.subr.mxu0 0.0
    %969 = vmatpush1.msra.mxu0 %v943
    %970 = vmatprep.subr.mxu0 0.0
    %971 = vmatpush1.msra.mxu0 %v944
    %972 = vmatprep.subr.mxu0 0.0
    %973 = vmatpush1.msra.mxu0 %v945
    %974 = vmatprep.subr.mxu0 0.0
    %975 = vmatpush1.msra.mxu0 %v946
    %976 = vmatprep.subr.mxu0 0.0
    %977 = vmatpush1.msra.mxu0 %v947
    %978 = vmatprep.subr.mxu0 0.0
    %979 = vmatpush1.msra.mxu0 %v948
    %980 = vmatprep.subr.mxu0 0.0
    %981 = vmatpush1.msra.mxu0 %v949
    %982 = vmatprep.subr.mxu0 0.0
    %983 = vmatpush1.msra.mxu0 %v950
    %984 = vmatprep.subr.mxu0 0.0
    %985 = vmatpush1.msra.mxu0 %v951
    %986 = vmatprep.subr.mxu0 0.0
    %987 = vmatpush1.msra.mxu0 %v952
    %988 = vmatprep.subr.mxu0 0.0
    %989 = vmatpush1.msra.mxu0 %v953
    %990 = vmatprep.subr.mxu0 0.0
    %991 = vmatpush1.msra.mxu0 %v954
    %992 = vmatprep.subr.mxu0 0.0
    %993 = vmatpush1.msra.mxu0 0.0
    %994 = vmatprep.subr.mxu0 0.0
    %995 = vmatpush1.msra.mxu0 0.0
    %996 = vmatprep.subr.mxu0 0.0
    %997 = vmatpush1.msra.mxu0 0.0
    %998 = vmatprep.subr.mxu0 0.0
    %999 = vmatpush1.msra.mxu0 0.0
    %1000 = vmatprep.subr.mxu0 0.0
    %1001 = vmatpush1.msra.mxu0 0.0
    %1002 = vmatprep.subr.mxu0 0.0
    %1003 = vmatpush1.msra.mxu0 0.0
    %1004 = vmatprep.subr.mxu0 0.0
    %1005 = vmatpush1.msra.mxu0 0.0
    %1006 = vmatprep.subr.mxu0 0.0
    %1007 = vmatpush1.msra.mxu0 0.0
    %1008 = vmatprep.subr.mxu0 0.0
    %1009 = vmatpush1.msra.mxu0 0.0
    %1010 = vmatprep.subr.mxu0 0.0
    %1011 = vmatpush1.msra.mxu0 0.0
    %1012 = vmatprep.subr.mxu0 0.0
    %1013 = vmatpush1.msra.mxu0 0.0
    %1014 = vmatprep.subr.mxu0 0.0
    %1015 = vmatpush1.msra.mxu0 0.0
    %1016 = vmatprep.subr.mxu0 0.0
    %1017 = vmatpush1.msra.mxu0 0.0
    %1018 = vmatprep.subr.mxu0 0.0
    %1019 = vmatpush1.msra.mxu0 0.0
    %1020 = vmatprep.subr.mxu0 0.0
    %1021 = vmatpush1.msra.mxu0 0.0
    %1022 = vmatprep.subr.mxu0 0.0
    %1023 = vmatpush1.msra.mxu0 0.0
    %1024 = vmatprep.mubr.f32.mxu0 0.0
    %1025 = vmatmul.mubr.f32.gmra.mrb[0].mxu0 %v937
    %v1026 = vpop.f32.mrb[0].mxu0
    %v1027 = vadd.f32 %v959, %v1026
    %v1028 = vpop.f32.mrb[0].mxu0
    %1029 = vdwg.mxu0
    %v1030 = vxor.u32 %v1027, 2147483648
    %v1031 = vmul.f32 %v1030, 1.442695
    %v1032 = vpow.pop %v1031
    %v1033 = vadd.f32 %v1032, 1.0
    %v1034 = vrcp.pop %v1033
    %v1035 = vmul.f32 1.0, %v1034
    %v1036 = vmul.f32 %v1027, %v1035
    %v1037 = vadd.f32 %v1036, %v27
    %s1038 = scalar_lea.vmem %s4, 640
    %v1039 = vld [vmem:[%s1038] sm:$0xff]
    %v1040 = vld [vmem:[%s1038 + $0x8] sm:$0xff]
    %v1041 = vld [vmem:[%s1038 + $0x10] sm:$0xff]
    %v1042 = vld [vmem:[%s1038 + $0x18] sm:$0xff]
    %v1043 = vld [vmem:[%s1038 + $0x20] sm:$0xff]
    %v1044 = vld [vmem:[%s1038 + $0x28] sm:$0xff]
    %v1045 = vld [vmem:[%s1038 + $0x30] sm:$0xff]
    %v1046 = vld [vmem:[%s1038 + $0x38] sm:$0xff]
    %v1047 = vld [vmem:[%s1038 + $0x40] sm:$0xff]
    %v1048 = vld [vmem:[%s1038 + $0x48] sm:$0xff]
    %v1049 = vld [vmem:[%s1038 + $0x50] sm:$0xff]
    %v1050 = vld [vmem:[%s1038 + $0x58] sm:$0xff]
    %v1051 = vld [vmem:[%s1038 + $0x60] sm:$0xff]
    %v1052 = vld [vmem:[%s1038 + $0x68] sm:$0xff]
    %v1053 = vld [vmem:[%s1038 + $0x70] sm:$0xff]
    %v1054 = vld [vmem:[%s1038 + $0x78] sm:$0xff]
    %v1055 = vld [vmem:[%s5 + $0x5] sm:$0x1]
    %v1056 = vlaneseq
    %v1057 = vshrl.u32 %v1056, 7
    %v1058 = vsub.s32 0, %v1057
    %v1059 = vrot.slane %v1055, %v1058
    %1060 = vmatprep.subr.mxu0 0.0
    %1061 = vmatpush1.msra.mxu0 %v1039
    %1062 = vmatprep.subr.mxu0 0.0
    %1063 = vmatpush1.msra.mxu0 %v1040
    %1064 = vmatprep.subr.mxu0 0.0
    %1065 = vmatpush1.msra.mxu0 %v1041
    %1066 = vmatprep.subr.mxu0 0.0
    %1067 = vmatpush1.msra.mxu0 %v1042
    %1068 = vmatprep.subr.mxu0 0.0
    %1069 = vmatpush1.msra.mxu0 %v1043
    %1070 = vmatprep.subr.mxu0 0.0
    %1071 = vmatpush1.msra.mxu0 %v1044
    %1072 = vmatprep.subr.mxu0 0.0
    %1073 = vmatpush1.msra.mxu0 %v1045
    %1074 = vmatprep.subr.mxu0 0.0
    %1075 = vmatpush1.msra.mxu0 %v1046
    %1076 = vmatprep.subr.mxu0 0.0
    %1077 = vmatpush1.msra.mxu0 %v1047
    %1078 = vmatprep.subr.mxu0 0.0
    %1079 = vmatpush1.msra.mxu0 %v1048
    %1080 = vmatprep.subr.mxu0 0.0
    %1081 = vmatpush1.msra.mxu0 %v1049
    %1082 = vmatprep.subr.mxu0 0.0
    %1083 = vmatpush1.msra.mxu0 %v1050
    %1084 = vmatprep.subr.mxu0 0.0
    %1085 = vmatpush1.msra.mxu0 %v1051
    %1086 = vmatprep.subr.mxu0 0.0
    %1087 = vmatpush1.msra.mxu0 %v1052
    %1088 = vmatprep.subr.mxu0 0.0
    %1089 = vmatpush1.msra.mxu0 %v1053
    %1090 = vmatprep.subr.mxu0 0.0
    %1091 = vmatpush1.msra.mxu0 %v1054
    %1092 = vmatprep.subr.mxu0 0.0
    %1093 = vmatpush1.msra.mxu0 0.0
    %1094 = vmatprep.subr.mxu0 0.0
    %1095 = vmatpush1.msra.mxu0 0.0
    %1096 = vmatprep.subr.mxu0 0.0
    %1097 = vmatpush1.msra.mxu0 0.0
    %1098 = vmatprep.subr.mxu0 0.0
    %1099 = vmatpush1.msra.mxu0 0.0
    %1100 = vmatprep.subr.mxu0 0.0
    %1101 = vmatpush1.msra.mxu0 0.0
    %1102 = vmatprep.subr.mxu0 0.0
    %1103 = vmatpush1.msra.mxu0 0.0
    %1104 = vmatprep.subr.mxu0 0.0
    %1105 = vmatpush1.msra.mxu0 0.0
    %1106 = vmatprep.subr.mxu0 0.0
    %1107 = vmatpush1.msra.mxu0 0.0
    %1108 = vmatprep.subr.mxu0 0.0
    %1109 = vmatpush1.msra.mxu0 0.0
    %1110 = vmatprep.subr.mxu0 0.0
    %1111 = vmatpush1.msra.mxu0 0.0
    %1112 = vmatprep.subr.mxu0 0.0
    %1113 = vmatpush1.msra.mxu0 0.0
    %1114 = vmatprep.subr.mxu0 0.0
    %1115 = vmatpush1.msra.mxu0 0.0
    %1116 = vmatprep.subr.mxu0 0.0
    %1117 = vmatpush1.msra.mxu0 0.0
    %1118 = vmatprep.subr.mxu0 0.0
    %1119 = vmatpush1.msra.mxu0 0.0
    %1120 = vmatprep.subr.mxu0 0.0
    %1121 = vmatpush1.msra.mxu0 0.0
    %1122 = vmatprep.subr.mxu0 0.0
    %1123 = vmatpush1.msra.mxu0 0.0
    %1124 = vmatprep.mubr.f32.mxu0 0.0
    %1125 = vmatmul.mubr.f32.gmra.mrb[0].mxu0 %v1037
    %v1126 = vpop.f32.mrb[0].mxu0
    %v1127 = vadd.f32 %v1059, %v1126
    %v1128 = vpop.f32.mrb[0].mxu0
    %1129 = vdwg.mxu0
    %v1130 = vxor.u32 %v1127, 2147483648
    %v1131 = vmul.f32 %v1130, 1.442695
    %v1132 = vpow.pop %v1131
    %v1133 = vadd.f32 %v1132, 1.0
    %v1134 = vrcp.pop %v1133
    %v1135 = vmul.f32 1.0, %v1134
    %v1136 = vmul.f32 %v1127, %v1135
    %s1137 = scalar_lea.vmem %s4, 768
    %v1138 = vld [vmem:[%s1137] sm:$0xff]
    %v1139 = vld [vmem:[%s1137 + $0x8] sm:$0xff]
    %v1140 = vld [vmem:[%s1137 + $0x10] sm:$0xff]
    %v1141 = vld [vmem:[%s1137 + $0x18] sm:$0xff]
    %v1142 = vld [vmem:[%s1137 + $0x20] sm:$0xff]
    %v1143 = vld [vmem:[%s1137 + $0x28] sm:$0xff]
    %v1144 = vld [vmem:[%s1137 + $0x30] sm:$0xff]
    %v1145 = vld [vmem:[%s1137 + $0x38] sm:$0xff]
    %v1146 = vld [vmem:[%s1137 + $0x40] sm:$0xff]
    %v1147 = vld [vmem:[%s1137 + $0x48] sm:$0xff]
    %v1148 = vld [vmem:[%s1137 + $0x50] sm:$0xff]
    %v1149 = vld [vmem:[%s1137 + $0x58] sm:$0xff]
    %v1150 = vld [vmem:[%s1137 + $0x60] sm:$0xff]
    %v1151 = vld [vmem:[%s1137 + $0x68] sm:$0xff]
    %v1152 = vld [vmem:[%s1137 + $0x70] sm:$0xff]
    %v1153 = vld [vmem:[%s1137 + $0x78] sm:$0xff]
    %v1154 = vld [vmem:[%s5 + $0x6] sm:$0x1]
    %v1155 = vlaneseq
    %v1156 = vshrl.u32 %v1155, 7
    %v1157 = vsub.s32 0, %v1156
    %v1158 = vrot.slane %v1154, %v1157
    %1159 = vmatprep.subr.mxu0 0.0
    %1160 = vmatpush1.msra.mxu0 %v1138
    %1161 = vmatprep.subr.mxu0 0.0
    %1162 = vmatpush1.msra.mxu0 %v1139
    %1163 = vmatprep.subr.mxu0 0.0
    %1164 = vmatpush1.msra.mxu0 %v1140
    %1165 = vmatprep.subr.mxu0 0.0
    %1166 = vmatpush1.msra.mxu0 %v1141
    %1167 = vmatprep.subr.mxu0 0.0
    %1168 = vmatpush1.msra.mxu0 %v1142
    %1169 = vmatprep.subr.mxu0 0.0
    %1170 = vmatpush1.msra.mxu0 %v1143
    %1171 = vmatprep.subr.mxu0 0.0
    %1172 = vmatpush1.msra.mxu0 %v1144
    %1173 = vmatprep.subr.mxu0 0.0
    %1174 = vmatpush1.msra.mxu0 %v1145
    %1175 = vmatprep.subr.mxu0 0.0
    %1176 = vmatpush1.msra.mxu0 %v1146
    %1177 = vmatprep.subr.mxu0 0.0
    %1178 = vmatpush1.msra.mxu0 %v1147
    %1179 = vmatprep.subr.mxu0 0.0
    %1180 = vmatpush1.msra.mxu0 %v1148
    %1181 = vmatprep.subr.mxu0 0.0
    %1182 = vmatpush1.msra.mxu0 %v1149
    %1183 = vmatprep.subr.mxu0 0.0
    %1184 = vmatpush1.msra.mxu0 %v1150
    %1185 = vmatprep.subr.mxu0 0.0
    %1186 = vmatpush1.msra.mxu0 %v1151
    %1187 = vmatprep.subr.mxu0 0.0
    %1188 = vmatpush1.msra.mxu0 %v1152
    %1189 = vmatprep.subr.mxu0 0.0
    %1190 = vmatpush1.msra.mxu0 %v1153
    %1191 = vmatprep.subr.mxu0 0.0
    %1192 = vmatpush1.msra.mxu0 0.0
    %1193 = vmatprep.subr.mxu0 0.0
    %1194 = vmatpush1.msra.mxu0 0.0
    %1195 = vmatprep.subr.mxu0 0.0
    %1196 = vmatpush1.msra.mxu0 0.0
    %1197 = vmatprep.subr.mxu0 0.0
    %1198 = vmatpush1.msra.mxu0 0.0
    %1199 = vmatprep.subr.mxu0 0.0
    %1200 = vmatpush1.msra.mxu0 0.0
    %1201 = vmatprep.subr.mxu0 0.0
    %1202 = vmatpush1.msra.mxu0 0.0
    %1203 = vmatprep.subr.mxu0 0.0
    %1204 = vmatpush1.msra.mxu0 0.0
    %1205 = vmatprep.subr.mxu0 0.0
    %1206 = vmatpush1.msra.mxu0 0.0
    %1207 = vmatprep.subr.mxu0 0.0
    %1208 = vmatpush1.msra.mxu0 0.0
    %1209 = vmatprep.subr.mxu0 0.0
    %1210 = vmatpush1.msra.mxu0 0.0
    %1211 = vmatprep.subr.mxu0 0.0
    %1212 = vmatpush1.msra.mxu0 0.0
    %1213 = vmatprep.subr.mxu0 0.0
    %1214 = vmatpush1.msra.mxu0 0.0
    %1215 = vmatprep.subr.mxu0 0.0
    %1216 = vmatpush1.msra.mxu0 0.0
    %1217 = vmatprep.subr.mxu0 0.0
    %1218 = vmatpush1.msra.mxu0 0.0
    %1219 = vmatprep.subr.mxu0 0.0
    %1220 = vmatpush1.msra.mxu0 0.0
    %1221 = vmatprep.subr.mxu0 0.0
    %1222 = vmatpush1.msra.mxu0 0.0
    %1223 = vmatprep.mubr.f32.mxu0 0.0
    %1224 = vmatmul.mubr.f32.gmra.mrb[0].mxu0 %v1136
    %v1225 = vpop.f32.mrb[0].mxu0
    %v1226 = vadd.f32 %v1158, %v1225
    %v1227 = vpop.f32.mrb[0].mxu0
    %1228 = vdwg.mxu0
    %v1229 = vxor.u32 %v1226, 2147483648
    %v1230 = vmul.f32 %v1229, 1.442695
    %v1231 = vpow.pop %v1230
    %v1232 = vadd.f32 %v1231, 1.0
    %v1233 = vrcp.pop %v1232
    %v1234 = vmul.f32 1.0, %v1233
    %v1235 = vmul.f32 %v1226, %v1234
    %v1236 = vadd.f32 %v1235, %v1037
    %s1237 = scalar_lea.vmem %s4, 896
    %v1238 = vld [vmem:[%s1237] sm:$0xff]
    %v1239 = vld [vmem:[%s1237 + $0x8] sm:$0xff]
    %v1240 = vld [vmem:[%s1237 + $0x10] sm:$0xff]
    %v1241 = vld [vmem:[%s1237 + $0x18] sm:$0xff]
    %v1242 = vld [vmem:[%s1237 + $0x20] sm:$0xff]
    %v1243 = vld [vmem:[%s1237 + $0x28] sm:$0xff]
    %v1244 = vld [vmem:[%s1237 + $0x30] sm:$0xff]
    %v1245 = vld [vmem:[%s1237 + $0x38] sm:$0xff]
    %v1246 = vld [vmem:[%s1237 + $0x40] sm:$0xff]
    %v1247 = vld [vmem:[%s1237 + $0x48] sm:$0xff]
    %v1248 = vld [vmem:[%s1237 + $0x50] sm:$0xff]
    %v1249 = vld [vmem:[%s1237 + $0x58] sm:$0xff]
    %v1250 = vld [vmem:[%s1237 + $0x60] sm:$0xff]
    %v1251 = vld [vmem:[%s1237 + $0x68] sm:$0xff]
    %v1252 = vld [vmem:[%s1237 + $0x70] sm:$0xff]
    %v1253 = vld [vmem:[%s1237 + $0x78] sm:$0xff]
    %v1254 = vld [vmem:[%s5 + $0x7] sm:$0x1]
    %v1255 = vlaneseq
    %v1256 = vshrl.u32 %v1255, 7
    %v1257 = vsub.s32 0, %v1256
    %v1258 = vrot.slane %v1254, %v1257
    %1259 = vmatprep.subr.mxu0 0.0
    %1260 = vmatpush1.msra.mxu0 %v1238
    %1261 = vmatprep.subr.mxu0 0.0
    %1262 = vmatpush1.msra.mxu0 %v1239
    %1263 = vmatprep.subr.mxu0 0.0
    %1264 = vmatpush1.msra.mxu0 %v1240
    %1265 = vmatprep.subr.mxu0 0.0
    %1266 = vmatpush1.msra.mxu0 %v1241
    %1267 = vmatprep.subr.mxu0 0.0
    %1268 = vmatpush1.msra.mxu0 %v1242
    %1269 = vmatprep.subr.mxu0 0.0
    %1270 = vmatpush1.msra.mxu0 %v1243
    %1271 = vmatprep.subr.mxu0 0.0
    %1272 = vmatpush1.msra.mxu0 %v1244
    %1273 = vmatprep.subr.mxu0 0.0
    %1274 = vmatpush1.msra.mxu0 %v1245
    %1275 = vmatprep.subr.mxu0 0.0
    %1276 = vmatpush1.msra.mxu0 %v1246
    %1277 = vmatprep.subr.mxu0 0.0
    %1278 = vmatpush1.msra.mxu0 %v1247
    %1279 = vmatprep.subr.mxu0 0.0
    %1280 = vmatpush1.msra.mxu0 %v1248
    %1281 = vmatprep.subr.mxu0 0.0
    %1282 = vmatpush1.msra.mxu0 %v1249
    %1283 = vmatprep.subr.mxu0 0.0
    %1284 = vmatpush1.msra.mxu0 %v1250
    %1285 = vmatprep.subr.mxu0 0.0
    %1286 = vmatpush1.msra.mxu0 %v1251
    %1287 = vmatprep.subr.mxu0 0.0
    %1288 = vmatpush1.msra.mxu0 %v1252
    %1289 = vmatprep.subr.mxu0 0.0
    %1290 = vmatpush1.msra.mxu0 %v1253
    %1291 = vmatprep.subr.mxu0 0.0
    %1292 = vmatpush1.msra.mxu0 0.0
    %1293 = vmatprep.subr.mxu0 0.0
    %1294 = vmatpush1.msra.mxu0 0.0
    %1295 = vmatprep.subr.mxu0 0.0
    %1296 = vmatpush1.msra.mxu0 0.0
    %1297 = vmatprep.subr.mxu0 0.0
    %1298 = vmatpush1.msra.mxu0 0.0
    %1299 = vmatprep.subr.mxu0 0.0
    %1300 = vmatpush1.msra.mxu0 0.0
    %1301 = vmatprep.subr.mxu0 0.0
    %1302 = vmatpush1.msra.mxu0 0.0
    %1303 = vmatprep.subr.mxu0 0.0
    %1304 = vmatpush1.msra.mxu0 0.0
    %1305 = vmatprep.subr.mxu0 0.0
    %1306 = vmatpush1.msra.mxu0 0.0
    %1307 = vmatprep.subr.mxu0 0.0
    %1308 = vmatpush1.msra.mxu0 0.0
    %1309 = vmatprep.subr.mxu0 0.0
    %1310 = vmatpush1.msra.mxu0 0.0
    %1311 = vmatprep.subr.mxu0 0.0
    %1312 = vmatpush1.msra.mxu0 0.0
    %1313 = vmatprep.subr.mxu0 0.0
    %1314 = vmatpush1.msra.mxu0 0.0
    %1315 = vmatprep.subr.mxu0 0.0
    %1316 = vmatpush1.msra.mxu0 0.0
    %1317 = vmatprep.subr.mxu0 0.0
    %1318 = vmatpush1.msra.mxu0 0.0
    %1319 = vmatprep.subr.mxu0 0.0
    %1320 = vmatpush1.msra.mxu0 0.0
    %1321 = vmatprep.subr.mxu0 0.0
    %1322 = vmatpush1.msra.mxu0 0.0
    %1323 = vmatprep.mubr.f32.mxu0 0.0
    %1324 = vmatmul.mubr.f32.gmra.mrb[0].mxu0 %v1236
    %v1325 = vpop.f32.mrb[0].mxu0
    %v1326 = vadd.f32 %v1258, %v1325
    %v1327 = vpop.f32.mrb[0].mxu0
    %1328 = vdwg.mxu0
    %v1329 = vxor.u32 %v1326, 2147483648
    %v1330 = vmul.f32 %v1329, 1.442695
    %v1331 = vpow.pop %v1330
    %v1332 = vadd.f32 %v1331, 1.0
    %v1333 = vrcp.pop %v1332
    %v1334 = vmul.f32 1.0, %v1333
    %v1335 = vmul.f32 %v1326, %v1334
    %s1336 = scalar_lea.vmem %s4, 1024
    %v1337 = vld [vmem:[%s1336] sm:$0xff]
    %v1338 = vld [vmem:[%s1336 + $0x8] sm:$0xff]
    %v1339 = vld [vmem:[%s1336 + $0x10] sm:$0xff]
    %v1340 = vld [vmem:[%s1336 + $0x18] sm:$0xff]
    %v1341 = vld [vmem:[%s1336 + $0x20] sm:$0xff]
    %v1342 = vld [vmem:[%s1336 + $0x28] sm:$0xff]
    %v1343 = vld [vmem:[%s1336 + $0x30] sm:$0xff]
    %v1344 = vld [vmem:[%s1336 + $0x38] sm:$0xff]
    %v1345 = vld [vmem:[%s1336 + $0x40] sm:$0xff]
    %v1346 = vld [vmem:[%s1336 + $0x48] sm:$0xff]
    %v1347 = vld [vmem:[%s1336 + $0x50] sm:$0xff]
    %v1348 = vld [vmem:[%s1336 + $0x58] sm:$0xff]
    %v1349 = vld [vmem:[%s1336 + $0x60] sm:$0xff]
    %v1350 = vld [vmem:[%s1336 + $0x68] sm:$0xff]
    %v1351 = vld [vmem:[%s1336 + $0x70] sm:$0xff]
    %v1352 = vld [vmem:[%s1336 + $0x78] sm:$0xff]
    %v1353 = vld [vmem:[%s5 + $0x8] sm:$0x1]
    %v1354 = vlaneseq
    %v1355 = vshrl.u32 %v1354, 7
    %v1356 = vsub.s32 0, %v1355
    %v1357 = vrot.slane %v1353, %v1356
    %1358 = vmatprep.subr.mxu0 0.0
    %1359 = vmatpush1.msra.mxu0 %v1337
    %1360 = vmatprep.subr.mxu0 0.0
    %1361 = vmatpush1.msra.mxu0 %v1338
    %1362 = vmatprep.subr.mxu0 0.0
    %1363 = vmatpush1.msra.mxu0 %v1339
    %1364 = vmatprep.subr.mxu0 0.0
    %1365 = vmatpush1.msra.mxu0 %v1340
    %1366 = vmatprep.subr.mxu0 0.0
    %1367 = vmatpush1.msra.mxu0 %v1341
    %1368 = vmatprep.subr.mxu0 0.0
    %1369 = vmatpush1.msra.mxu0 %v1342
    %1370 = vmatprep.subr.mxu0 0.0
    %1371 = vmatpush1.msra.mxu0 %v1343
    %1372 = vmatprep.subr.mxu0 0.0
    %1373 = vmatpush1.msra.mxu0 %v1344
    %1374 = vmatprep.subr.mxu0 0.0
    %1375 = vmatpush1.msra.mxu0 %v1345
    %1376 = vmatprep.subr.mxu0 0.0
    %1377 = vmatpush1.msra.mxu0 %v1346
    %1378 = vmatprep.subr.mxu0 0.0
    %1379 = vmatpush1.msra.mxu0 %v1347
    %1380 = vmatprep.subr.mxu0 0.0
    %1381 = vmatpush1.msra.mxu0 %v1348
    %1382 = vmatprep.subr.mxu0 0.0
    %1383 = vmatpush1.msra.mxu0 %v1349
    %1384 = vmatprep.subr.mxu0 0.0
    %1385 = vmatpush1.msra.mxu0 %v1350
    %1386 = vmatprep.subr.mxu0 0.0
    %1387 = vmatpush1.msra.mxu0 %v1351
    %1388 = vmatprep.subr.mxu0 0.0
    %1389 = vmatpush1.msra.mxu0 %v1352
    %1390 = vmatprep.subr.mxu0 0.0
    %1391 = vmatpush1.msra.mxu0 0.0
    %1392 = vmatprep.subr.mxu0 0.0
    %1393 = vmatpush1.msra.mxu0 0.0
    %1394 = vmatprep.subr.mxu0 0.0
    %1395 = vmatpush1.msra.mxu0 0.0
    %1396 = vmatprep.subr.mxu0 0.0
    %1397 = vmatpush1.msra.mxu0 0.0
    %1398 = vmatprep.subr.mxu0 0.0
    %1399 = vmatpush1.msra.mxu0 0.0
    %1400 = vmatprep.subr.mxu0 0.0
    %1401 = vmatpush1.msra.mxu0 0.0
    %1402 = vmatprep.subr.mxu0 0.0
    %1403 = vmatpush1.msra.mxu0 0.0
    %1404 = vmatprep.subr.mxu0 0.0
    %1405 = vmatpush1.msra.mxu0 0.0
    %1406 = vmatprep.subr.mxu0 0.0
    %1407 = vmatpush1.msra.mxu0 0.0
    %1408 = vmatprep.subr.mxu0 0.0
    %1409 = vmatpush1.msra.mxu0 0.0
    %1410 = vmatprep.subr.mxu0 0.0
    %1411 = vmatpush1.msra.mxu0 0.0
    %1412 = vmatprep.subr.mxu0 0.0
    %1413 = vmatpush1.msra.mxu0 0.0
    %1414 = vmatprep.subr.mxu0 0.0
    %1415 = vmatpush1.msra.mxu0 0.0
    %1416 = vmatprep.subr.mxu0 0.0
    %1417 = vmatpush1.msra.mxu0 0.0
    %1418 = vmatprep.subr.mxu0 0.0
    %1419 = vmatpush1.msra.mxu0 0.0
    %1420 = vmatprep.subr.mxu0 0.0
    %1421 = vmatpush1.msra.mxu0 0.0
    %1422 = vmatprep.mubr.f32.mxu0 0.0
    %1423 = vmatmul.mubr.f32.gmra.mrb[0].mxu0 %v1335
    %v1424 = vpop.f32.mrb[0].mxu0
    %v1425 = vadd.f32 %v1357, %v1424
    %v1426 = vpop.f32.mrb[0].mxu0
    %1427 = vdwg.mxu0
    %v1428 = vxor.u32 %v1425, 2147483648
    %v1429 = vmul.f32 %v1428, 1.442695
    %v1430 = vpow.pop %v1429
    %v1431 = vadd.f32 %v1430, 1.0
    %v1432 = vrcp.pop %v1431
    %v1433 = vmul.f32 1.0, %v1432
    %v1434 = vmul.f32 %v1425, %v1433
    %v1435 = vadd.f32 %v1434, %v1236
    %1436 = vmatprep.subr.mxu0 0.0
    %1437 = vmatpush1.msra.mxu0 %v1435
    %1438 = vmatprep.subr.mxu0 0.0
    %1439 = vmatpush1.msra.mxu0 0.0
    %1440 = vmatprep.subr.mxu0 0.0
    %1441 = vmatpush1.msra.mxu0 0.0
    %1442 = vmatprep.subr.mxu0 0.0
    %1443 = vmatpush1.msra.mxu0 0.0
    %1444 = vmatprep.subr.mxu0 0.0
    %1445 = vmatpush1.msra.mxu0 0.0
    %1446 = vmatprep.subr.mxu0 0.0
    %1447 = vmatpush1.msra.mxu0 0.0
    %1448 = vmatprep.subr.mxu0 0.0
    %1449 = vmatpush1.msra.mxu0 0.0
    %1450 = vmatprep.subr.mxu0 0.0
    %1451 = vmatpush1.msra.mxu0 0.0
    %1452 = vmatprep.subr.mxu0 0.0
    %1453 = vmatpush1.msra.mxu0 0.0
    %1454 = vmatprep.subr.mxu0 0.0
    %1455 = vmatpush1.msra.mxu0 0.0
    %1456 = vmatprep.subr.mxu0 0.0
    %1457 = vmatpush1.msra.mxu0 0.0
    %1458 = vmatprep.subr.mxu0 0.0
    %1459 = vmatpush1.msra.mxu0 0.0
    %1460 = vmatprep.subr.mxu0 0.0
    %1461 = vmatpush1.msra.mxu0 0.0
    %1462 = vmatprep.subr.mxu0 0.0
    %1463 = vmatpush1.msra.mxu0 0.0
    %1464 = vmatprep.subr.mxu0 0.0
    %1465 = vmatpush1.msra.mxu0 0.0
    %1466 = vmatprep.subr.mxu0 0.0
    %1467 = vmatpush1.msra.mxu0 0.0
    %1468 = vmatprep.subr.mxu0 0.0
    %1469 = vmatpush1.msra.mxu0 0.0
    %1470 = vmatprep.subr.mxu0 0.0
    %1471 = vmatpush1.msra.mxu0 0.0
    %1472 = vmatprep.subr.mxu0 0.0
    %1473 = vmatpush1.msra.mxu0 0.0
    %1474 = vmatprep.subr.mxu0 0.0
    %1475 = vmatpush1.msra.mxu0 0.0
    %1476 = vmatprep.subr.mxu0 0.0
    %1477 = vmatpush1.msra.mxu0 0.0
    %1478 = vmatprep.subr.mxu0 0.0
    %1479 = vmatpush1.msra.mxu0 0.0
    %1480 = vmatprep.subr.mxu0 0.0
    %1481 = vmatpush1.msra.mxu0 0.0
    %1482 = vmatprep.subr.mxu0 0.0
    %1483 = vmatpush1.msra.mxu0 0.0
    %1484 = vmatprep.subr.mxu0 0.0
    %1485 = vmatpush1.msra.mxu0 0.0
    %1486 = vmatprep.subr.mxu0 0.0
    %1487 = vmatpush1.msra.mxu0 0.0
    %1488 = vmatprep.subr.mxu0 0.0
    %1489 = vmatpush1.msra.mxu0 0.0
    %1490 = vmatprep.subr.mxu0 0.0
    %1491 = vmatpush1.msra.mxu0 0.0
    %1492 = vmatprep.subr.mxu0 0.0
    %1493 = vmatpush1.msra.mxu0 0.0
    %1494 = vmatprep.subr.mxu0 0.0
    %1495 = vmatpush1.msra.mxu0 0.0
    %1496 = vmatprep.subr.mxu0 0.0
    %1497 = vmatpush1.msra.mxu0 0.0
    %1498 = vmatprep.subr.mxu0 0.0
    %1499 = vmatpush1.msra.mxu0 0.0
    %1500 = vmatprep.mubr.f32.mxu0 0.0
    %1501 = vmatmul.mubr.f32.gmra.mrb[0].mxu0 %v349
    %v1502 = vpop.f32.mrb[0].mxu0
    %v1503 = vadd.f32 0.0, %v1502
    %v1504 = vpop.f32.mrb[0].mxu0
    %1505 = vmatprep.mubr.f32.mxu0 0.0
    %1506 = vmatmul.mubr.f32.gmra.mrb[0].mxu0 %v352
    %v1507 = vpop.f32.mrb[0].mxu0
    %v1508 = vadd.f32 0.0, %v1507
    %v1509 = vpop.f32.mrb[0].mxu0
    %1510 = vdwg.mxu0
    %1511 = vmatprep.subr.mxu0 0.0
    %1512 = vmatpush1.msra.mxu0 %v1435
    %1513 = vmatprep.subr.mxu0 0.0
    %1514 = vmatpush1.msra.mxu0 0.0
    %1515 = vmatprep.subr.mxu0 0.0
    %1516 = vmatpush1.msra.mxu0 0.0
    %1517 = vmatprep.subr.mxu0 0.0
    %1518 = vmatpush1.msra.mxu0 0.0
    %1519 = vmatprep.subr.mxu0 0.0
    %1520 = vmatpush1.msra.mxu0 0.0
    %1521 = vmatprep.subr.mxu0 0.0
    %1522 = vmatpush1.msra.mxu0 0.0
    %1523 = vmatprep.subr.mxu0 0.0
    %1524 = vmatpush1.msra.mxu0 0.0
    %1525 = vmatprep.subr.mxu0 0.0
    %1526 = vmatpush1.msra.mxu0 0.0
    %1527 = vmatprep.subr.mxu0 0.0
    %1528 = vmatpush1.msra.mxu0 0.0
    %1529 = vmatprep.subr.mxu0 0.0
    %1530 = vmatpush1.msra.mxu0 0.0
    %1531 = vmatprep.subr.mxu0 0.0
    %1532 = vmatpush1.msra.mxu0 0.0
    %1533 = vmatprep.subr.mxu0 0.0
    %1534 = vmatpush1.msra.mxu0 0.0
    %1535 = vmatprep.subr.mxu0 0.0
    %1536 = vmatpush1.msra.mxu0 0.0
    %1537 = vmatprep.subr.mxu0 0.0
    %1538 = vmatpush1.msra.mxu0 0.0
    %1539 = vmatprep.subr.mxu0 0.0
    %1540 = vmatpush1.msra.mxu0 0.0
    %1541 = vmatprep.subr.mxu0 0.0
    %1542 = vmatpush1.msra.mxu0 0.0
    %1543 = vmatprep.subr.mxu0 0.0
    %1544 = vmatpush1.msra.mxu0 0.0
    %1545 = vmatprep.subr.mxu0 0.0
    %1546 = vmatpush1.msra.mxu0 0.0
    %1547 = vmatprep.subr.mxu0 0.0
    %1548 = vmatpush1.msra.mxu0 0.0
    %1549 = vmatprep.subr.mxu0 0.0
    %1550 = vmatpush1.msra.mxu0 0.0
    %1551 = vmatprep.subr.mxu0 0.0
    %1552 = vmatpush1.msra.mxu0 0.0
    %1553 = vmatprep.subr.mxu0 0.0
    %1554 = vmatpush1.msra.mxu0 0.0
    %1555 = vmatprep.subr.mxu0 0.0
    %1556 = vmatpush1.msra.mxu0 0.0
    %1557 = vmatprep.subr.mxu0 0.0
    %1558 = vmatpush1.msra.mxu0 0.0
    %1559 = vmatprep.subr.mxu0 0.0
    %1560 = vmatpush1.msra.mxu0 0.0
    %1561 = vmatprep.subr.mxu0 0.0
    %1562 = vmatpush1.msra.mxu0 0.0
    %1563 = vmatprep.subr.mxu0 0.0
    %1564 = vmatpush1.msra.mxu0 0.0
    %1565 = vmatprep.subr.mxu0 0.0
    %1566 = vmatpush1.msra.mxu0 0.0
    %1567 = vmatprep.subr.mxu0 0.0
    %1568 = vmatpush1.msra.mxu0 0.0
    %1569 = vmatprep.subr.mxu0 0.0
    %1570 = vmatpush1.msra.mxu0 0.0
    %1571 = vmatprep.subr.mxu0 0.0
    %1572 = vmatpush1.msra.mxu0 0.0
    %1573 = vmatprep.subr.mxu0 0.0
    %1574 = vmatpush1.msra.mxu0 0.0
    %1575 = vmatprep.mubr.f32.mxu0 0.0
    %1576 = vmatmul.mubr.f32.gmra.mrb[0].mxu0 %v430
    %v1577 = vpop.f32.mrb[0].mxu0
    %v1578 = vadd.f32 0.0, %v1577
    %v1579 = vpop.f32.mrb[0].mxu0
    %1580 = vmatprep.mubr.f32.mxu0 0.0
    %1581 = vmatmul.mubr.f32.gmra.mrb[0].mxu0 %v433
    %v1582 = vpop.f32.mrb[0].mxu0
    %v1583 = vadd.f32 0.0, %v1582
    %v1584 = vpop.f32.mrb[0].mxu0
    %1585 = vdwg.mxu0
    %1586 = vmatprep.subr.mxu0 0.0
    %1587 = vmatpush1.msra.mxu0 %v510
    %1588 = vmatprep.subr.mxu0 0.0
    %1589 = vmatpush1.msra.mxu0 %v511
    %1590 = vmatprep.subr.mxu0 0.0
    %1591 = vmatpush1.msra.mxu0 %v512
    %1592 = vmatprep.subr.mxu0 0.0
    %1593 = vmatpush1.msra.mxu0 %v513
    %1594 = vmatprep.subr.mxu0 0.0
    %1595 = vmatpush1.msra.mxu0 %v514
    %1596 = vmatprep.subr.mxu0 0.0
    %1597 = vmatpush1.msra.mxu0 %v515
    %1598 = vmatprep.subr.mxu0 0.0
    %1599 = vmatpush1.msra.mxu0 %v516
    %1600 = vmatprep.subr.mxu0 0.0
    %1601 = vmatpush1.msra.mxu0 %v517
    %1602 = vmatprep.subr.mxu0 0.0
    %1603 = vmatpush1.msra.mxu0 %v518
    %1604 = vmatprep.subr.mxu0 0.0
    %1605 = vmatpush1.msra.mxu0 %v519
    %1606 = vmatprep.subr.mxu0 0.0
    %1607 = vmatpush1.msra.mxu0 %v520
    %1608 = vmatprep.subr.mxu0 0.0
    %1609 = vmatpush1.msra.mxu0 %v521
    %1610 = vmatprep.subr.mxu0 0.0
    %1611 = vmatpush1.msra.mxu0 %v522
    %1612 = vmatprep.subr.mxu0 0.0
    %1613 = vmatpush1.msra.mxu0 %v523
    %1614 = vmatprep.subr.mxu0 0.0
    %1615 = vmatpush1.msra.mxu0 %v524
    %1616 = vmatprep.subr.mxu0 0.0
    %1617 = vmatpush1.msra.mxu0 %v525
    %1618 = vmatprep.subr.mxu0 0.0
    %1619 = vmatpush1.msra.mxu0 %v526
    %1620 = vmatprep.subr.mxu0 0.0
    %1621 = vmatpush1.msra.mxu0 %v527
    %1622 = vmatprep.subr.mxu0 0.0
    %1623 = vmatpush1.msra.mxu0 %v528
    %1624 = vmatprep.subr.mxu0 0.0
    %1625 = vmatpush1.msra.mxu0 %v529
    %1626 = vmatprep.subr.mxu0 0.0
    %1627 = vmatpush1.msra.mxu0 %v530
    %1628 = vmatprep.subr.mxu0 0.0
    %1629 = vmatpush1.msra.mxu0 %v531
    %1630 = vmatprep.subr.mxu0 0.0
    %1631 = vmatpush1.msra.mxu0 %v532
    %1632 = vmatprep.subr.mxu0 0.0
    %1633 = vmatpush1.msra.mxu0 %v533
    %1634 = vmatprep.subr.mxu0 0.0
    %1635 = vmatpush1.msra.mxu0 %v534
    %1636 = vmatprep.subr.mxu0 0.0
    %1637 = vmatpush1.msra.mxu0 %v535
    %1638 = vmatprep.subr.mxu0 0.0
    %1639 = vmatpush1.msra.mxu0 %v536
    %1640 = vmatprep.subr.mxu0 0.0
    %1641 = vmatpush1.msra.mxu0 %v537
    %1642 = vmatprep.subr.mxu0 0.0
    %1643 = vmatpush1.msra.mxu0 %v538
    %1644 = vmatprep.subr.mxu0 0.0
    %1645 = vmatpush1.msra.mxu0 %v539
    %1646 = vmatprep.subr.mxu0 0.0
    %1647 = vmatpush1.msra.mxu0 %v540
    %1648 = vmatprep.subr.mxu0 0.0
    %1649 = vmatpush1.msra.mxu0 %v541
    %1650 = vmatprep.mubr.f32.mxu0 %v1578
    %1651 = vmatmul.mubr.f32.gmra.mrb[0].mxu0 %v1503
    %v1652 = vpop.f32.mrb[0].mxu0
    %v1653 = vadd.f32 %v241, %v1652
    %v1654 = vpop.f32.mrb[0].mxu0
    %1655 = vmatprep.mubr.f32.mxu0 %v1583
    %1656 = vmatmul.mubr.f32.gmra.mrb[0].mxu0 %v1508
    %v1657 = vpop.f32.mrb[0].mxu0
    %v1658 = vadd.f32 %v246, %v1657
    %v1659 = vpop.f32.mrb[0].mxu0
    %1660 = vdwg.mxu0
    %v1661 = vxor.u32 %v1653, 2147483648
    %v1662 = vxor.u32 %v1658, 2147483648
    %v1663 = vmul.f32 %v1661, 1.442695
    %v1664 = vpow.pop %v1663
    %v1665 = vmul.f32 %v1662, 1.442695
    %v1666 = vpow.pop %v1665
    %v1667 = vadd.f32 %v1664, 1.0
    %v1668 = vadd.f32 %v1666, 1.0
    %v1669 = vrcp.pop %v1667
    %v1670 = vmul.f32 1.0, %v1669
    %v1671 = vrcp.pop %v1668
    %v1672 = vmul.f32 1.0, %v1671
    %v1673 = vmul.f32 %v1653, %v1670
    %v1674 = vmul.f32 %v1658, %v1672
    %v1675 = vmul.f32 %v144, %v1673
    %v1676 = vmul.f32 %v149, %v1674
    %1677 = vmatprep.subr.mxu0 0.0
    %1678 = vmatpush1.msra.mxu0 %v1675
    %1679 = vmatprep.subr.mxu0 0.0
    %1680 = vmatpush1.msra.mxu0 %v1676
    %1681 = vmatprep.subr.mxu0 0.0
    %1682 = vmatpush1.msra.mxu0 0.0
    %1683 = vmatprep.subr.mxu0 0.0
    %1684 = vmatpush1.msra.mxu0 0.0
    %1685 = vmatprep.subr.mxu0 0.0
    %1686 = vmatpush1.msra.mxu0 0.0
    %1687 = vmatprep.subr.mxu0 0.0
    %1688 = vmatpush1.msra.mxu0 0.0
    %1689 = vmatprep.subr.mxu0 0.0
    %1690 = vmatpush1.msra.mxu0 0.0
    %1691 = vmatprep.subr.mxu0 0.0
    %1692 = vmatpush1.msra.mxu0 0.0
    %1693 = vmatprep.subr.mxu0 0.0
    %1694 = vmatpush1.msra.mxu0 0.0
    %1695 = vmatprep.subr.mxu0 0.0
    %1696 = vmatpush1.msra.mxu0 0.0
    %1697 = vmatprep.subr.mxu0 0.0
    %1698 = vmatpush1.msra.mxu0 0.0
    %1699 = vmatprep.subr.mxu0 0.0
    %1700 = vmatpush1.msra.mxu0 0.0
    %1701 = vmatprep.subr.mxu0 0.0
    %1702 = vmatpush1.msra.mxu0 0.0
    %1703 = vmatprep.subr.mxu0 0.0
    %1704 = vmatpush1.msra.mxu0 0.0
    %1705 = vmatprep.subr.mxu0 0.0
    %1706 = vmatpush1.msra.mxu0 0.0
    %1707 = vmatprep.subr.mxu0 0.0
    %1708 = vmatpush1.msra.mxu0 0.0
    %1709 = vmatprep.subr.mxu0 0.0
    %1710 = vmatpush1.msra.mxu0 0.0
    %1711 = vmatprep.subr.mxu0 0.0
    %1712 = vmatpush1.msra.mxu0 0.0
    %1713 = vmatprep.subr.mxu0 0.0
    %1714 = vmatpush1.msra.mxu0 0.0
    %1715 = vmatprep.subr.mxu0 0.0
    %1716 = vmatpush1.msra.mxu0 0.0
    %1717 = vmatprep.subr.mxu0 0.0
    %1718 = vmatpush1.msra.mxu0 0.0
    %1719 = vmatprep.subr.mxu0 0.0
    %1720 = vmatpush1.msra.mxu0 0.0
    %1721 = vmatprep.subr.mxu0 0.0
    %1722 = vmatpush1.msra.mxu0 0.0
    %1723 = vmatprep.subr.mxu0 0.0
    %1724 = vmatpush1.msra.mxu0 0.0
    %1725 = vmatprep.subr.mxu0 0.0
    %1726 = vmatpush1.msra.mxu0 0.0
    %1727 = vmatprep.subr.mxu0 0.0
    %1728 = vmatpush1.msra.mxu0 0.0
    %1729 = vmatprep.subr.mxu0 0.0
    %1730 = vmatpush1.msra.mxu0 0.0
    %1731 = vmatprep.subr.mxu0 0.0
    %1732 = vmatpush1.msra.mxu0 0.0
    %1733 = vmatprep.subr.mxu0 0.0
    %1734 = vmatpush1.msra.mxu0 0.0
    %1735 = vmatprep.subr.mxu0 0.0
    %1736 = vmatpush1.msra.mxu0 0.0
    %1737 = vmatprep.subr.mxu0 0.0
    %1738 = vmatpush1.msra.mxu0 0.0
    %1739 = vmatprep.subr.mxu0 0.0
    %1740 = vmatpush1.msra.mxu0 0.0
    %1741 = vmatprep.mubr.f32.mxu0 0.0
    %1742 = vmatmul.mubr.f32.gmra.mrb[0].mxu0 %v667
    %v1743 = vpop.f32.mrb[0].mxu0
    %v1744 = vadd.f32 %v1435, %v1743
    %v1745 = vpop.f32.mrb[0].mxu0
    %1746 = vdwg.mxu0
    %1747 = vst [vmem:[#allocation2] sm:$0xff] %v1744
    // Predicated region
    $region30: #{global_mp_forward.1} parent=1 // pred_check
      _
    $region31: #{global_mp_forward.1} parent=1 // pred_check_branch
      %1749 = sbr.rel (0) target = $region33
    $region32: #{global_mp_forward.1} parent=1 // pred_region
      %s1751 = ssub.s32 128, 128
      %1752 = vsyncadd [#allocation3], %s1751
      %s1754 = sshll.u32 [#allocation2], 4
      %s1755 = int_to_ptr.vmem [resolvable:$true] %s1754
      %1757 = dma.vmem_to_hbm [thread:$0]  %s1755, 128, %s7, [#allocation3]
    $region33: #{global_mp_forward.1} parent=1 // pred_fallthru
      _
    // Predicated region
    $region34: #{global_mp_forward.1} parent=1 // pred_check
      _
    $region35: #{global_mp_forward.1} parent=1 // pred_check_branch
      %1759 = sbr.rel (0) target = $region37
    $region36: #{global_mp_forward.1} parent=1 // pred_region
      %1760 = dma.done [#allocation3], 128
    $region37: #{global_mp_forward.1} parent=1 // pred_fallthru
      _
    %1761 = vsyncpa [#allocation3], 1

</llo_original>
